<compile_context>
chip_gen: v5e
topology: v5e:2x2
jax: 0.10.0
libtpu: 0.0.40
codegen_flags: <defaults>
</compile_context>

<pallas_src>
import math

import jax
import jax.numpy as jnp
from jax import lax
from jax.experimental import pallas as pl
from jax.experimental.pallas import tpu as pltpu


def _quick_gelu(x):
    return x * jax.nn.sigmoid(1.702 * x)


def _make_convpass_kernel(H, N, dim, bb):
    """Kernel processing `bb` images (bb*N tokens) per grid step."""
    BN = bb * N

    def kernel(x_ref, wd_ref, bd_ref, cw_ref, cb_ref, wu_ref, bu_ref, o_ref):
        x = x_ref[...].astype(jnp.float32)                       # (BN, C)

        # adapter_down + QuickGELU
        xd = jnp.dot(x, wd_ref[...], preferred_element_type=jnp.float32)
        xg = _quick_gelu(xd + bd_ref[...])                       # (BN, dim)

        # Token-position indices for the zero-padding validity masks.
        # N == H*H  =>  flat_idx % H is the column within each image, and
        # flat_idx % N is the token index within each image (shifts that cross
        # an image boundary are exactly the ones the mask zeroes out).
        row = lax.broadcasted_iota(jnp.int32, (BN, 1), 0)
        tok = row % N
        col = row % H

        # im2col-lite: 9 masked, shifted copies concatenated on the lane axis,
        # then a single fused matmul with the (9*dim, dim) conv weight.
        parts = []
        for dy in range(3):
            for dx in range(3):
                s = (dy - 1) * H + (dx - 1)
                if s == 0:                                        # center tap
                    parts.append(xg)
                    continue
                shifted = jnp.roll(xg, -s, axis=0)                # out[m]=xg[m+s]
                c = col + (dx - 1)
                t = tok + s
                valid = (c >= 0) & (c < H) & (t >= 0) & (t < N)
                parts.append(shifted * valid.astype(jnp.float32))
        patches = jnp.concatenate(parts, axis=1)                  # (BN, 9*dim)

        acc = jnp.dot(patches, cw_ref[...],
                      preferred_element_type=jnp.float32) + cb_ref[...]

        # QuickGELU after conv
        xg2 = _quick_gelu(acc)
        # TODO(synk): nn.Dropout(0.1) implemented as eval-mode identity (no RNG mask).

        # adapter_up
        xu = jnp.dot(xg2, wu_ref[...], preferred_element_type=jnp.float32)
        o_ref[...] = (xu + bu_ref[...]).astype(o_ref.dtype)

    return kernel


def _pick_block_b(B, N, max_bb=8):
    """Largest batch-block <= max_bb that divides B, keeps the (8,128) sublane
    rule satisfied, and (preferably) leaves an even grid for v7x's 2 TCs."""
    best = None
    for bb in range(min(B, max_bb), 0, -1):
        if B % bb != 0:
            continue
        if (bb * N) % 8 != 0 and bb != B:
            continue
        if best is None:
            best = bb
        if (B // bb) % 2 == 0:
            return bb
    return best if best is not None else B


def convpass_pallas(x, w_down, b_down, conv_w, conv_b, w_up, b_up, dim=8,
                    block_b=None, vmem_limit_bytes=None):
    B, N, C = x.shape
    H = int(math.sqrt(N))
    assert H * H == N, "token count must be a perfect square"

    bb = _pick_block_b(B, N) if block_b is None else block_b
    assert B % bb == 0, "block_b must divide the batch size"
    BN = bb * N

    # Fused conv weight: HWIO (3,3,in,out) -> (9*in, out), tap-major rows
    # (matches the in-kernel concat order dy*3 + dx).
    cw2 = conv_w.reshape(9 * dim, dim)

    # Host-side flatten (metadata-only) so the kernel sees lane-dense 2-D tiles.
    x2 = x.reshape(B * N, C)

    kernel = _make_convpass_kernel(H, N, dim, bb)
    grid_spec = pltpu.PrefetchScalarGridSpec(
        num_scalar_prefetch=0,
        grid=(B // bb,),
        in_specs=[
            pl.BlockSpec((BN, C), lambda i: (i, 0)),            # x (Bb images)
            pl.BlockSpec((C, dim), lambda i: (0, 0)),           # W_down
            pl.BlockSpec((1, dim), lambda i: (0, 0)),           # b_down
            pl.BlockSpec((9 * dim, dim), lambda i: (0, 0)),     # fused conv W
            pl.BlockSpec((1, dim), lambda i: (0, 0)),           # conv bias
            pl.BlockSpec((dim, C), lambda i: (0, 0)),           # W_up
            pl.BlockSpec((1, C), lambda i: (0, 0)),             # b_up
        ],
        out_specs=pl.BlockSpec((BN, C), lambda i: (i, 0)),
    )
    out = pl.pallas_call(
        kernel,
        grid_spec=grid_spec,
        out_shape=jax.ShapeDtypeStruct((B * N, C), x.dtype),
        compiler_params=pltpu.CompilerParams(
            dimension_semantics=("parallel",),
            vmem_limit_bytes=vmem_limit_bytes),
    )(x2, w_down, b_down, cw2, conv_b, w_up, b_up)
    return out.reshape(B, N, C)


def init_convpass_params(key, in_dim, dim=8, xavier_init=True):
    """Deterministic parameter init mirroring Convpass.__init__."""
    k_conv, k_down = jax.random.split(key)

    # adapter_conv: torch weight (out=dim, in=dim, 3, 3)
    if xavier_init:
        bound = math.sqrt(6.0 / (dim * 9 + dim * 9))
        conv_w_oihw = jax.random.uniform(k_conv, (dim, dim, 3, 3),
                                         jnp.float32, -bound, bound)
    else:
        conv_w_oihw = jnp.zeros((dim, dim, 3, 3), jnp.float32)
        conv_w_oihw = conv_w_oihw.at[:, :, 1, 1].add(jnp.eye(8, dtype=jnp.float32))
    conv_w = jnp.transpose(conv_w_oihw, (2, 3, 1, 0))   # HWIO (3,3,in,out)
    conv_b = jnp.zeros((1, dim), jnp.float32)

    # adapter_down: torch Linear(in_dim -> dim), weight (dim, in_dim), xavier
    bound = math.sqrt(6.0 / (in_dim + dim))
    w_down = jax.random.uniform(k_down, (dim, in_dim),
                                jnp.float32, -bound, bound).T   # (in_dim, dim)
    b_down = jnp.zeros((1, dim), jnp.float32)

    # adapter_up: zero-initialized
    w_up = jnp.zeros((dim, in_dim), jnp.float32)
    b_up = jnp.zeros((1, in_dim), jnp.float32)
    return w_down, b_down, conv_w, conv_b, w_up, b_up


def convpass_reference(x, w_down, b_down, conv_w, conv_b, w_up, b_up, dim=8):
    """Pure-JAX reference of the PyTorch forward (dropout in eval mode)."""
    B, N, C = x.shape
    H = int(math.sqrt(N))
    xd = x @ w_down + b_down                         # (B, N, dim)
    xp = _quick_gelu(xd.reshape(B, H, H, dim))       # NHWC
    y = lax.conv_general_dilated(
        xp, conv_w, window_strides=(1, 1), padding="SAME",
        dimension_numbers=("NHWC", "HWIO", "NHWC")) + conv_b
    y = _quick_gelu(y.reshape(B, N, dim))
    return y @ w_up + b_up


if __name__ == "__main__":
    B, N, C, dim = 4, 16, 32, 8                      # H = 4, grid = (2,) with Bb=2
    key = jax.random.PRNGKey(0)
    kx, kp, kt = jax.random.split(key, 3)

    x = jax.random.normal(kx, (B, N, C), jnp.float32)
    params = init_convpass_params(kp, C, dim, xavier_init=True)
    w_down, b_down, conv_w, conv_b, w_up, b_up = params

    # Numerical validation with a non-zero up-projection (the module's zero init
    # would make the end-to-end check trivially pass).
    w_up_t = 0.1 * jax.random.normal(kt, (dim, C), jnp.float32)
    b_up_t = jnp.zeros((1, C), jnp.float32)
    out_t = convpass_pallas(x, w_down, b_down, conv_w, conv_b, w_up_t, b_up_t, dim=dim)
    ref_t = convpass_reference(x, w_down, b_down, conv_w, conv_b, w_up_t, b_up_t, dim=dim)
    assert jnp.allclose(out_t, ref_t, atol=1e-5, rtol=1e-5), \
        f"max abs err = {float(jnp.max(jnp.abs(out_t - ref_t)))}"

    # bf16 activation I/O path (halves the dominant HBM bytes; f32 accumulation).
    out_bf = convpass_pallas(x.astype(jnp.bfloat16), w_down, b_down, conv_w,
                             conv_b, w_up_t, b_up_t, dim=dim)
    assert jnp.allclose(out_bf.astype(jnp.float32), ref_t, atol=5e-2, rtol=5e-2), \
        f"bf16 max abs err = {float(jnp.max(jnp.abs(out_bf.astype(jnp.float32) - ref_t)))}"

    # Faithful module-initialized forward (adapter_up zero-initialized).
    out = convpass_pallas(x, *params, dim=dim)
    jax.block_until_ready(out)
    print("KERNEL_OK")
</pallas_src>

<mosaic_0001>
module attributes {stable_mosaic.version = 11 : i64} {
  func.func @kernel(%arg0: i32, %arg1: memref<32x32xf32, #tpu.memory_space<vmem>>, %arg2: memref<32x8xf32, #tpu.memory_space<vmem>>, %arg3: memref<1x8xf32, #tpu.memory_space<vmem>>, %arg4: memref<72x8xf32, #tpu.memory_space<vmem>>, %arg5: memref<1x8xf32, #tpu.memory_space<vmem>>, %arg6: memref<8x32xf32, #tpu.memory_space<vmem>>, %arg7: memref<1x32xf32, #tpu.memory_space<vmem>>, %arg8: memref<32x32xf32, #tpu.memory_space<vmem>>) attributes {dimension_semantics = [#tpu.dimension_semantics<parallel>], iteration_bounds = array<i64: 2>, scalar_prefetch = 0 : i64, scratch_operands = 0 : i64, tpu.core_type = #tpu.core_type<tc>, window_params = [{transform_indices = @transform_0, window_bounds = array<i64: 32, 32>}, {pipeline_mode = #tpu.pipeline_mode<synchronous>, transform_indices = @transform_1, window_bounds = array<i64: 32, 8>}, {pipeline_mode = #tpu.pipeline_mode<synchronous>, transform_indices = @transform_2, window_bounds = array<i64: 1, 8>}, {pipeline_mode = #tpu.pipeline_mode<synchronous>, transform_indices = @transform_3, window_bounds = array<i64: 72, 8>}, {pipeline_mode = #tpu.pipeline_mode<synchronous>, transform_indices = @transform_4, window_bounds = array<i64: 1, 8>}, {pipeline_mode = #tpu.pipeline_mode<synchronous>, transform_indices = @transform_5, window_bounds = array<i64: 8, 32>}, {pipeline_mode = #tpu.pipeline_mode<synchronous>, transform_indices = @transform_6, window_bounds = array<i64: 1, 32>}, {transform_indices = @transform_7, window_bounds = array<i64: 32, 32>}]} {
    %c0 = arith.constant 0 : index
    %c0_0 = arith.constant 0 : index
    %0 = vector.load %arg1[%c0, %c0_0] : memref<32x32xf32, #tpu.memory_space<vmem>>, vector<32x32xf32>
    %c0_1 = arith.constant 0 : index
    %c0_2 = arith.constant 0 : index
    %1 = vector.load %arg2[%c0_1, %c0_2] : memref<32x8xf32, #tpu.memory_space<vmem>>, vector<32x8xf32>
    %cst = arith.constant dense<0.000000e+00> : vector<32x8xf32>
    %2 = tpu.matmul %0, %1, %cst {dimension_numbers = #tpu.dot_dimension_numbers<[1], [0], [0], [1], [0, 0, 1, 1], [], []>} : vector<32x32xf32>, vector<32x8xf32>, vector<32x8xf32> -> vector<32x8xf32>
    %c0_3 = arith.constant 0 : index
    %c0_4 = arith.constant 0 : index
    %3 = vector.load %arg3[%c0_3, %c0_4] : memref<1x8xf32, #tpu.memory_space<vmem>>, vector<1x8xf32>
    %4 = vector.broadcast %3 : vector<1x8xf32> to vector<32x8xf32>
    %5 = arith.addf %2, %4 : vector<32x8xf32>
    %cst_5 = arith.constant 1.702000e+00 : f32
    %6 = vector.broadcast %cst_5 : f32 to vector<32x8xf32>
    %7 = arith.mulf %6, %5 : vector<32x8xf32>
    %8 = arith.negf %7 : vector<32x8xf32>
    %9 = math.exp %8 : vector<32x8xf32>
    %cst_6 = arith.constant 1.000000e+00 : f32
    %10 = vector.broadcast %cst_6 : f32 to vector<32x8xf32>
    %11 = arith.addf %10, %9 : vector<32x8xf32>
    %12 = arith.divf %10, %11 : vector<32x8xf32>
    %13 = arith.mulf %5, %12 : vector<32x8xf32>
    %14 = tpu.iota {dimensions = array<i32: 0>} : vector<32x1xi32>
    %c16_i32 = arith.constant 16 : i32
    %c0_i32 = arith.constant 0 : i32
    %15 = arith.cmpi eq, %c16_i32, %c0_i32 : i32
    %c1_i32 = arith.constant 1 : i32
    %16 = arith.select %15, %c1_i32, %c16_i32 : i32
    %17 = vector.broadcast %16 : i32 to vector<32x1xi32>
    %18 = arith.remsi %14, %17 : vector<32x1xi32>
    %c0_i32_7 = arith.constant 0 : i32
    %19 = vector.broadcast %c0_i32_7 : i32 to vector<32x1xi32>
    %20 = arith.cmpi ne, %18, %19 : vector<32x1xi32>
    %c0_i32_8 = arith.constant 0 : i32
    %21 = vector.broadcast %c0_i32_8 : i32 to vector<32x1xi32>
    %22 = arith.cmpi slt, %18, %21 : vector<32x1xi32>
    %c0_i32_9 = arith.constant 0 : i32
    %23 = arith.cmpi slt, %16, %c0_i32_9 : i32
    %24 = vector.broadcast %23 : i1 to vector<32x1xi1>
    %25 = vector.broadcast %24 : vector<32x1xi1> to vector<32x1xi1>
    %26 = arith.xori %22, %25 : vector<32x1xi1>
    %27 = arith.andi %26, %20 : vector<32x1xi1>
    %28 = vector.broadcast %16 : i32 to vector<32x1xi32>
    %29 = arith.addi %18, %28 : vector<32x1xi32>
    %30 = arith.select %27, %29, %18 : vector<32x1xi1>, vector<32x1xi32>
    %c4_i32 = arith.constant 4 : i32
    %c0_i32_10 = arith.constant 0 : i32
    %31 = arith.cmpi eq, %c4_i32, %c0_i32_10 : i32
    %c1_i32_11 = arith.constant 1 : i32
    %32 = arith.select %31, %c1_i32_11, %c4_i32 : i32
    %33 = vector.broadcast %32 : i32 to vector<32x1xi32>
    %34 = arith.remsi %14, %33 : vector<32x1xi32>
    %c0_i32_12 = arith.constant 0 : i32
    %35 = vector.broadcast %c0_i32_12 : i32 to vector<32x1xi32>
    %36 = arith.cmpi ne, %34, %35 : vector<32x1xi32>
    %c0_i32_13 = arith.constant 0 : i32
    %37 = vector.broadcast %c0_i32_13 : i32 to vector<32x1xi32>
    %38 = arith.cmpi slt, %34, %37 : vector<32x1xi32>
    %c0_i32_14 = arith.constant 0 : i32
    %39 = arith.cmpi slt, %32, %c0_i32_14 : i32
    %40 = vector.broadcast %39 : i1 to vector<32x1xi1>
    %41 = vector.broadcast %40 : vector<32x1xi1> to vector<32x1xi1>
    %42 = arith.xori %38, %41 : vector<32x1xi1>
    %43 = arith.andi %42, %36 : vector<32x1xi1>
    %44 = vector.broadcast %32 : i32 to vector<32x1xi32>
    %45 = arith.addi %34, %44 : vector<32x1xi32>
    %46 = arith.select %43, %45, %34 : vector<32x1xi1>, vector<32x1xi32>
    %47 = vector.extract_strided_slice %13 {offsets = [27, 0], sizes = [5, 8], strides = [1, 1]} : vector<32x8xf32> to vector<5x8xf32>
    %48 = vector.extract_strided_slice %13 {offsets = [0, 0], sizes = [27, 8], strides = [1, 1]} : vector<32x8xf32> to vector<27x8xf32>
    %49 = tpu.concatenate %47, %48 in 0 : vector<5x8xf32>, vector<27x8xf32> -> vector<32x8xf32>
    %c-1_i32 = arith.constant -1 : i32
    %50 = vector.broadcast %c-1_i32 : i32 to vector<32x1xi32>
    %51 = arith.addi %46, %50 : vector<32x1xi32>
    %c-5_i32 = arith.constant -5 : i32
    %52 = vector.broadcast %c-5_i32 : i32 to vector<32x1xi32>
    %53 = arith.addi %30, %52 : vector<32x1xi32>
    %c0_i32_15 = arith.constant 0 : i32
    %54 = vector.broadcast %c0_i32_15 : i32 to vector<32x1xi32>
    %55 = arith.cmpi sge, %51, %54 : vector<32x1xi32>
    %c4_i32_16 = arith.constant 4 : i32
    %56 = vector.broadcast %c4_i32_16 : i32 to vector<32x1xi32>
    %57 = arith.cmpi slt, %51, %56 : vector<32x1xi32>
    %58 = arith.andi %55, %57 : vector<32x1xi1>
    %c0_i32_17 = arith.constant 0 : i32
    %59 = vector.broadcast %c0_i32_17 : i32 to vector<32x1xi32>
    %60 = arith.cmpi sge, %53, %59 : vector<32x1xi32>
    %61 = arith.andi %58, %60 : vector<32x1xi1>
    %c16_i32_18 = arith.constant 16 : i32
    %62 = vector.broadcast %c16_i32_18 : i32 to vector<32x1xi32>
    %63 = arith.cmpi slt, %53, %62 : vector<32x1xi32>
    %64 = arith.andi %61, %63 : vector<32x1xi1>
    %65 = arith.extui %64 : vector<32x1xi1> to vector<32x1xi32>
    %66 = arith.sitofp %65 : vector<32x1xi32> to vector<32x1xf32>
    %67 = vector.broadcast %66 : vector<32x1xf32> to vector<32x8xf32>
    %68 = arith.mulf %49, %67 : vector<32x8xf32>
    %69 = vector.extract_strided_slice %13 {offsets = [28, 0], sizes = [4, 8], strides = [1, 1]} : vector<32x8xf32> to vector<4x8xf32>
    %70 = vector.extract_strided_slice %13 {offsets = [0, 0], sizes = [28, 8], strides = [1, 1]} : vector<32x8xf32> to vector<28x8xf32>
    %71 = tpu.concatenate %69, %70 in 0 : vector<4x8xf32>, vector<28x8xf32> -> vector<32x8xf32>
    %c0_i32_19 = arith.constant 0 : i32
    %72 = vector.broadcast %c0_i32_19 : i32 to vector<32x1xi32>
    %73 = arith.addi %46, %72 : vector<32x1xi32>
    %c-4_i32 = arith.constant -4 : i32
    %74 = vector.broadcast %c-4_i32 : i32 to vector<32x1xi32>
    %75 = arith.addi %30, %74 : vector<32x1xi32>
    %c0_i32_20 = arith.constant 0 : i32
    %76 = vector.broadcast %c0_i32_20 : i32 to vector<32x1xi32>
    %77 = arith.cmpi sge, %73, %76 : vector<32x1xi32>
    %c4_i32_21 = arith.constant 4 : i32
    %78 = vector.broadcast %c4_i32_21 : i32 to vector<32x1xi32>
    %79 = arith.cmpi slt, %73, %78 : vector<32x1xi32>
    %80 = arith.andi %77, %79 : vector<32x1xi1>
    %c0_i32_22 = arith.constant 0 : i32
    %81 = vector.broadcast %c0_i32_22 : i32 to vector<32x1xi32>
    %82 = arith.cmpi sge, %75, %81 : vector<32x1xi32>
    %83 = arith.andi %80, %82 : vector<32x1xi1>
    %c16_i32_23 = arith.constant 16 : i32
    %84 = vector.broadcast %c16_i32_23 : i32 to vector<32x1xi32>
    %85 = arith.cmpi slt, %75, %84 : vector<32x1xi32>
    %86 = arith.andi %83, %85 : vector<32x1xi1>
    %87 = arith.extui %86 : vector<32x1xi1> to vector<32x1xi32>
    %88 = arith.sitofp %87 : vector<32x1xi32> to vector<32x1xf32>
    %89 = vector.broadcast %88 : vector<32x1xf32> to vector<32x8xf32>
    %90 = arith.mulf %71, %89 : vector<32x8xf32>
    %91 = vector.extract_strided_slice %13 {offsets = [29, 0], sizes = [3, 8], strides = [1, 1]} : vector<32x8xf32> to vector<3x8xf32>
    %92 = vector.extract_strided_slice %13 {offsets = [0, 0], sizes = [29, 8], strides = [1, 1]} : vector<32x8xf32> to vector<29x8xf32>
    %93 = tpu.concatenate %91, %92 in 0 : vector<3x8xf32>, vector<29x8xf32> -> vector<32x8xf32>
    %c1_i32_24 = arith.constant 1 : i32
    %94 = vector.broadcast %c1_i32_24 : i32 to vector<32x1xi32>
    %95 = arith.addi %46, %94 : vector<32x1xi32>
    %c-3_i32 = arith.constant -3 : i32
    %96 = vector.broadcast %c-3_i32 : i32 to vector<32x1xi32>
    %97 = arith.addi %30, %96 : vector<32x1xi32>
    %c0_i32_25 = arith.constant 0 : i32
    %98 = vector.broadcast %c0_i32_25 : i32 to vector<32x1xi32>
    %99 = arith.cmpi sge, %95, %98 : vector<32x1xi32>
    %c4_i32_26 = arith.constant 4 : i32
    %100 = vector.broadcast %c4_i32_26 : i32 to vector<32x1xi32>
    %101 = arith.cmpi slt, %95, %100 : vector<32x1xi32>
    %102 = arith.andi %99, %101 : vector<32x1xi1>
    %c0_i32_27 = arith.constant 0 : i32
    %103 = vector.broadcast %c0_i32_27 : i32 to vector<32x1xi32>
    %104 = arith.cmpi sge, %97, %103 : vector<32x1xi32>
    %105 = arith.andi %102, %104 : vector<32x1xi1>
    %c16_i32_28 = arith.constant 16 : i32
    %106 = vector.broadcast %c16_i32_28 : i32 to vector<32x1xi32>
    %107 = arith.cmpi slt, %97, %106 : vector<32x1xi32>
    %108 = arith.andi %105, %107 : vector<32x1xi1>
    %109 = arith.extui %108 : vector<32x1xi1> to vector<32x1xi32>
    %110 = arith.sitofp %109 : vector<32x1xi32> to vector<32x1xf32>
    %111 = vector.broadcast %110 : vector<32x1xf32> to vector<32x8xf32>
    %112 = arith.mulf %93, %111 : vector<32x8xf32>
    %113 = vector.extract_strided_slice %13 {offsets = [31, 0], sizes = [1, 8], strides = [1, 1]} : vector<32x8xf32> to vector<1x8xf32>
    %114 = vector.extract_strided_slice %13 {offsets = [0, 0], sizes = [31, 8], strides = [1, 1]} : vector<32x8xf32> to vector<31x8xf32>
    %115 = tpu.concatenate %113, %114 in 0 : vector<1x8xf32>, vector<31x8xf32> -> vector<32x8xf32>
    %c-1_i32_29 = arith.constant -1 : i32
    %116 = vector.broadcast %c-1_i32_29 : i32 to vector<32x1xi32>
    %117 = arith.addi %46, %116 : vector<32x1xi32>
    %c-1_i32_30 = arith.constant -1 : i32
    %118 = vector.broadcast %c-1_i32_30 : i32 to vector<32x1xi32>
    %119 = arith.addi %30, %118 : vector<32x1xi32>
    %c0_i32_31 = arith.constant 0 : i32
    %120 = vector.broadcast %c0_i32_31 : i32 to vector<32x1xi32>
    %121 = arith.cmpi sge, %117, %120 : vector<32x1xi32>
    %c4_i32_32 = arith.constant 4 : i32
    %122 = vector.broadcast %c4_i32_32 : i32 to vector<32x1xi32>
    %123 = arith.cmpi slt, %117, %122 : vector<32x1xi32>
    %124 = arith.andi %121, %123 : vector<32x1xi1>
    %c0_i32_33 = arith.constant 0 : i32
    %125 = vector.broadcast %c0_i32_33 : i32 to vector<32x1xi32>
    %126 = arith.cmpi sge, %119, %125 : vector<32x1xi32>
    %127 = arith.andi %124, %126 : vector<32x1xi1>
    %c16_i32_34 = arith.constant 16 : i32
    %128 = vector.broadcast %c16_i32_34 : i32 to vector<32x1xi32>
    %129 = arith.cmpi slt, %119, %128 : vector<32x1xi32>
    %130 = arith.andi %127, %129 : vector<32x1xi1>
    %131 = arith.extui %130 : vector<32x1xi1> to vector<32x1xi32>
    %132 = arith.sitofp %131 : vector<32x1xi32> to vector<32x1xf32>
    %133 = vector.broadcast %132 : vector<32x1xf32> to vector<32x8xf32>
    %134 = arith.mulf %115, %133 : vector<32x8xf32>
    %135 = vector.extract_strided_slice %13 {offsets = [1, 0], sizes = [31, 8], strides = [1, 1]} : vector<32x8xf32> to vector<31x8xf32>
    %136 = vector.extract_strided_slice %13 {offsets = [0, 0], sizes = [1, 8], strides = [1, 1]} : vector<32x8xf32> to vector<1x8xf32>
    %137 = tpu.concatenate %135, %136 in 0 : vector<31x8xf32>, vector<1x8xf32> -> vector<32x8xf32>
    %c1_i32_35 = arith.constant 1 : i32
    %138 = vector.broadcast %c1_i32_35 : i32 to vector<32x1xi32>
    %139 = arith.addi %46, %138 : vector<32x1xi32>
    %c1_i32_36 = arith.constant 1 : i32
    %140 = vector.broadcast %c1_i32_36 : i32 to vector<32x1xi32>
    %141 = arith.addi %30, %140 : vector<32x1xi32>
    %c0_i32_37 = arith.constant 0 : i32
    %142 = vector.broadcast %c0_i32_37 : i32 to vector<32x1xi32>
    %143 = arith.cmpi sge, %139, %142 : vector<32x1xi32>
    %c4_i32_38 = arith.constant 4 : i32
    %144 = vector.broadcast %c4_i32_38 : i32 to vector<32x1xi32>
    %145 = arith.cmpi slt, %139, %144 : vector<32x1xi32>
    %146 = arith.andi %143, %145 : vector<32x1xi1>
    %c0_i32_39 = arith.constant 0 : i32
    %147 = vector.broadcast %c0_i32_39 : i32 to vector<32x1xi32>
    %148 = arith.cmpi sge, %141, %147 : vector<32x1xi32>
    %149 = arith.andi %146, %148 : vector<32x1xi1>
    %c16_i32_40 = arith.constant 16 : i32
    %150 = vector.broadcast %c16_i32_40 : i32 to vector<32x1xi32>
    %151 = arith.cmpi slt, %141, %150 : vector<32x1xi32>
    %152 = arith.andi %149, %151 : vector<32x1xi1>
    %153 = arith.extui %152 : vector<32x1xi1> to vector<32x1xi32>
    %154 = arith.sitofp %153 : vector<32x1xi32> to vector<32x1xf32>
    %155 = vector.broadcast %154 : vector<32x1xf32> to vector<32x8xf32>
    %156 = arith.mulf %137, %155 : vector<32x8xf32>
    %157 = vector.extract_strided_slice %13 {offsets = [3, 0], sizes = [29, 8], strides = [1, 1]} : vector<32x8xf32> to vector<29x8xf32>
    %158 = vector.extract_strided_slice %13 {offsets = [0, 0], sizes = [3, 8], strides = [1, 1]} : vector<32x8xf32> to vector<3x8xf32>
    %159 = tpu.concatenate %157, %158 in 0 : vector<29x8xf32>, vector<3x8xf32> -> vector<32x8xf32>
    %c-1_i32_41 = arith.constant -1 : i32
    %160 = vector.broadcast %c-1_i32_41 : i32 to vector<32x1xi32>
    %161 = arith.addi %46, %160 : vector<32x1xi32>
    %c3_i32 = arith.constant 3 : i32
    %162 = vector.broadcast %c3_i32 : i32 to vector<32x1xi32>
    %163 = arith.addi %30, %162 : vector<32x1xi32>
    %c0_i32_42 = arith.constant 0 : i32
    %164 = vector.broadcast %c0_i32_42 : i32 to vector<32x1xi32>
    %165 = arith.cmpi sge, %161, %164 : vector<32x1xi32>
    %c4_i32_43 = arith.constant 4 : i32
    %166 = vector.broadcast %c4_i32_43 : i32 to vector<32x1xi32>
    %167 = arith.cmpi slt, %161, %166 : vector<32x1xi32>
    %168 = arith.andi %165, %167 : vector<32x1xi1>
    %c0_i32_44 = arith.constant 0 : i32
    %169 = vector.broadcast %c0_i32_44 : i32 to vector<32x1xi32>
    %170 = arith.cmpi sge, %163, %169 : vector<32x1xi32>
    %171 = arith.andi %168, %170 : vector<32x1xi1>
    %c16_i32_45 = arith.constant 16 : i32
    %172 = vector.broadcast %c16_i32_45 : i32 to vector<32x1xi32>
    %173 = arith.cmpi slt, %163, %172 : vector<32x1xi32>
    %174 = arith.andi %171, %173 : vector<32x1xi1>
    %175 = arith.extui %174 : vector<32x1xi1> to vector<32x1xi32>
    %176 = arith.sitofp %175 : vector<32x1xi32> to vector<32x1xf32>
    %177 = vector.broadcast %176 : vector<32x1xf32> to vector<32x8xf32>
    %178 = arith.mulf %159, %177 : vector<32x8xf32>
    %179 = vector.extract_strided_slice %13 {offsets = [4, 0], sizes = [28, 8], strides = [1, 1]} : vector<32x8xf32> to vector<28x8xf32>
    %180 = vector.extract_strided_slice %13 {offsets = [0, 0], sizes = [4, 8], strides = [1, 1]} : vector<32x8xf32> to vector<4x8xf32>
    %181 = tpu.concatenate %179, %180 in 0 : vector<28x8xf32>, vector<4x8xf32> -> vector<32x8xf32>
    %c0_i32_46 = arith.constant 0 : i32
    %182 = vector.broadcast %c0_i32_46 : i32 to vector<32x1xi32>
    %183 = arith.addi %46, %182 : vector<32x1xi32>
    %c4_i32_47 = arith.constant 4 : i32
    %184 = vector.broadcast %c4_i32_47 : i32 to vector<32x1xi32>
    %185 = arith.addi %30, %184 : vector<32x1xi32>
    %c0_i32_48 = arith.constant 0 : i32
    %186 = vector.broadcast %c0_i32_48 : i32 to vector<32x1xi32>
    %187 = arith.cmpi sge, %183, %186 : vector<32x1xi32>
    %c4_i32_49 = arith.constant 4 : i32
    %188 = vector.broadcast %c4_i32_49 : i32 to vector<32x1xi32>
    %189 = arith.cmpi slt, %183, %188 : vector<32x1xi32>
    %190 = arith.andi %187, %189 : vector<32x1xi1>
    %c0_i32_50 = arith.constant 0 : i32
    %191 = vector.broadcast %c0_i32_50 : i32 to vector<32x1xi32>
    %192 = arith.cmpi sge, %185, %191 : vector<32x1xi32>
    %193 = arith.andi %190, %192 : vector<32x1xi1>
    %c16_i32_51 = arith.constant 16 : i32
    %194 = vector.broadcast %c16_i32_51 : i32 to vector<32x1xi32>
    %195 = arith.cmpi slt, %185, %194 : vector<32x1xi32>
    %196 = arith.andi %193, %195 : vector<32x1xi1>
    %197 = arith.extui %196 : vector<32x1xi1> to vector<32x1xi32>
    %198 = arith.sitofp %197 : vector<32x1xi32> to vector<32x1xf32>
    %199 = vector.broadcast %198 : vector<32x1xf32> to vector<32x8xf32>
    %200 = arith.mulf %181, %199 : vector<32x8xf32>
    %201 = vector.extract_strided_slice %13 {offsets = [5, 0], sizes = [27, 8], strides = [1, 1]} : vector<32x8xf32> to vector<27x8xf32>
    %202 = vector.extract_strided_slice %13 {offsets = [0, 0], sizes = [5, 8], strides = [1, 1]} : vector<32x8xf32> to vector<5x8xf32>
    %203 = tpu.concatenate %201, %202 in 0 : vector<27x8xf32>, vector<5x8xf32> -> vector<32x8xf32>
    %c1_i32_52 = arith.constant 1 : i32
    %204 = vector.broadcast %c1_i32_52 : i32 to vector<32x1xi32>
    %205 = arith.addi %46, %204 : vector<32x1xi32>
    %c5_i32 = arith.constant 5 : i32
    %206 = vector.broadcast %c5_i32 : i32 to vector<32x1xi32>
    %207 = arith.addi %30, %206 : vector<32x1xi32>
    %c0_i32_53 = arith.constant 0 : i32
    %208 = vector.broadcast %c0_i32_53 : i32 to vector<32x1xi32>
    %209 = arith.cmpi sge, %205, %208 : vector<32x1xi32>
    %c4_i32_54 = arith.constant 4 : i32
    %210 = vector.broadcast %c4_i32_54 : i32 to vector<32x1xi32>
    %211 = arith.cmpi slt, %205, %210 : vector<32x1xi32>
    %212 = arith.andi %209, %211 : vector<32x1xi1>
    %c0_i32_55 = arith.constant 0 : i32
    %213 = vector.broadcast %c0_i32_55 : i32 to vector<32x1xi32>
    %214 = arith.cmpi sge, %207, %213 : vector<32x1xi32>
    %215 = arith.andi %212, %214 : vector<32x1xi1>
    %c16_i32_56 = arith.constant 16 : i32
    %216 = vector.broadcast %c16_i32_56 : i32 to vector<32x1xi32>
    %217 = arith.cmpi slt, %207, %216 : vector<32x1xi32>
    %218 = arith.andi %215, %217 : vector<32x1xi1>
    %219 = arith.extui %218 : vector<32x1xi1> to vector<32x1xi32>
    %220 = arith.sitofp %219 : vector<32x1xi32> to vector<32x1xf32>
    %221 = vector.broadcast %220 : vector<32x1xf32> to vector<32x8xf32>
    %222 = arith.mulf %203, %221 : vector<32x8xf32>
    %223 = tpu.concatenate %68, %90, %112, %134, %13, %156, %178, %200, %222 in 1 : vector<32x8xf32>, vector<32x8xf32>, vector<32x8xf32>, vector<32x8xf32>, vector<32x8xf32>, vector<32x8xf32>, vector<32x8xf32>, vector<32x8xf32>, vector<32x8xf32> -> vector<32x72xf32>
    %c0_57 = arith.constant 0 : index
    %c0_58 = arith.constant 0 : index
    %224 = vector.load %arg4[%c0_57, %c0_58] : memref<72x8xf32, #tpu.memory_space<vmem>>, vector<72x8xf32>
    %cst_59 = arith.constant dense<0.000000e+00> : vector<32x8xf32>
    %225 = tpu.matmul %223, %224, %cst_59 {dimension_numbers = #tpu.dot_dimension_numbers<[1], [0], [0], [1], [0, 0, 1, 1], [], []>} : vector<32x72xf32>, vector<72x8xf32>, vector<32x8xf32> -> vector<32x8xf32>
    %c0_60 = arith.constant 0 : index
    %c0_61 = arith.constant 0 : index
    %226 = vector.load %arg5[%c0_60, %c0_61] : memref<1x8xf32, #tpu.memory_space<vmem>>, vector<1x8xf32>
    %227 = vector.broadcast %226 : vector<1x8xf32> to vector<32x8xf32>
    %228 = arith.addf %225, %227 : vector<32x8xf32>
    %cst_62 = arith.constant 1.702000e+00 : f32
    %229 = vector.broadcast %cst_62 : f32 to vector<32x8xf32>
    %230 = arith.mulf %229, %228 : vector<32x8xf32>
    %231 = arith.negf %230 : vector<32x8xf32>
    %232 = math.exp %231 : vector<32x8xf32>
    %cst_63 = arith.constant 1.000000e+00 : f32
    %233 = vector.broadcast %cst_63 : f32 to vector<32x8xf32>
    %234 = arith.addf %233, %232 : vector<32x8xf32>
    %235 = arith.divf %233, %234 : vector<32x8xf32>
    %236 = arith.mulf %228, %235 : vector<32x8xf32>
    %c0_64 = arith.constant 0 : index
    %c0_65 = arith.constant 0 : index
    %237 = vector.load %arg6[%c0_64, %c0_65] : memref<8x32xf32, #tpu.memory_space<vmem>>, vector<8x32xf32>
    %cst_66 = arith.constant dense<0.000000e+00> : vector<32x32xf32>
    %238 = tpu.matmul %236, %237, %cst_66 {dimension_numbers = #tpu.dot_dimension_numbers<[1], [0], [0], [1], [0, 0, 1, 1], [], []>} : vector<32x8xf32>, vector<8x32xf32>, vector<32x32xf32> -> vector<32x32xf32>
    %c0_67 = arith.constant 0 : index
    %c0_68 = arith.constant 0 : index
    %239 = vector.load %arg7[%c0_67, %c0_68] : memref<1x32xf32, #tpu.memory_space<vmem>>, vector<1x32xf32>
    %240 = vector.broadcast %239 : vector<1x32xf32> to vector<32x32xf32>
    %241 = arith.addf %238, %240 : vector<32x32xf32>
    %c0_69 = arith.constant 0 : index
    %c0_70 = arith.constant 0 : index
    %242 = vector.load %arg8[%c0_69, %c0_70] : memref<32x32xf32, #tpu.memory_space<vmem>>, vector<32x32xf32>
    tpu.vector_store %arg8[%c0_69, %c0_70], %241 {strides = array<i32>} : memref<32x32xf32, #tpu.memory_space<vmem>>, vector<32x32xf32>,
    return
  }
  func.func @transform_0(%arg0: i32) -> (i32, i32) {
    %c0_i32 = arith.constant 0 : i32
    %c0_i32_0 = arith.constant 0 : i32
    return %arg0, %c0_i32 : i32, i32
  }
  func.func @transform_1(%arg0: i32) -> (i32, i32) {
    %c0_i32 = arith.constant 0 : i32
    %c0_i32_0 = arith.constant 0 : i32
    %c0_i32_1 = arith.constant 0 : i32
    return %c0_i32, %c0_i32_0 : i32, i32
  }
  func.func @transform_2(%arg0: i32) -> (i32, i32) {
    %c0_i32 = arith.constant 0 : i32
    %c0_i32_0 = arith.constant 0 : i32
    %c0_i32_1 = arith.constant 0 : i32
    return %c0_i32, %c0_i32_0 : i32, i32
  }
  func.func @transform_3(%arg0: i32) -> (i32, i32) {
    %c0_i32 = arith.constant 0 : i32
    %c0_i32_0 = arith.constant 0 : i32
    %c0_i32_1 = arith.constant 0 : i32
    return %c0_i32, %c0_i32_0 : i32, i32
  }
  func.func @transform_4(%arg0: i32) -> (i32, i32) {
    %c0_i32 = arith.constant 0 : i32
    %c0_i32_0 = arith.constant 0 : i32
    %c0_i32_1 = arith.constant 0 : i32
    return %c0_i32, %c0_i32_0 : i32, i32
  }
  func.func @transform_5(%arg0: i32) -> (i32, i32) {
    %c0_i32 = arith.constant 0 : i32
    %c0_i32_0 = arith.constant 0 : i32
    %c0_i32_1 = arith.constant 0 : i32
    return %c0_i32, %c0_i32_0 : i32, i32
  }
  func.func @transform_6(%arg0: i32) -> (i32, i32) {
    %c0_i32 = arith.constant 0 : i32
    %c0_i32_0 = arith.constant 0 : i32
    %c0_i32_1 = arith.constant 0 : i32
    return %c0_i32, %c0_i32_0 : i32, i32
  }
  func.func @transform_7(%arg0: i32) -> (i32, i32) {
    %c0_i32 = arith.constant 0 : i32
    %c0_i32_0 = arith.constant 0 : i32
    return %arg0, %c0_i32 : i32, i32
  }
}

</mosaic_0001>

<llo_original>
// kernel: tpu_custom_call.1
$region0: #{tpu_custom_call.1}
  #allocation0 [shape = 'u32[]', space=smem, size = 0x4, offset = 0x4, fixed_abs, tag = 'smem constant byte address 0x4 - core index']
  #allocation1 [shape = 'u32[72,128]{1,0:T(1,128)}', space=vmem, size = 0x9000, scoped, tag = 'internal scratch']
  %s0 = inlined_call_operand.vmem [shape: f32[64,32], index: 0, kind: input, shape index: {}]
  %s1 = inlined_call_operand.vmem [shape: f32[32,8], index: 1, kind: input, shape index: {}]
  %s2 = inlined_call_operand.vmem [shape: f32[1,8], index: 2, kind: input, shape index: {}]
  %s3 = inlined_call_operand.vmem [shape: f32[72,8], index: 3, kind: input, shape index: {}]
  %s4 = inlined_call_operand.vmem [shape: f32[1,8], index: 4, kind: input, shape index: {}]
  %s5 = inlined_call_operand.vmem [shape: f32[8,32], index: 5, kind: input, shape index: {}]
  %s6 = inlined_call_operand.vmem [shape: f32[1,32], index: 6, kind: input, shape index: {}]
  %s7 = inlined_call_operand.vmem [shape: f32[64,32], index: 7, kind: output, shape index: {}]
  %s8 = sld [smem:[#allocation0]]
  $region61: #{tpu_custom_call.1} parent=0
    _
  %s10 = ssub.s32 1, %s8
  %s11 = scalar_select 0, %s10, %s8
  loop: start=0, step=1, limit=4
  $region2: #{tpu_custom_call.1} parent=0 // loop_pre_header
    _
  $region3: #{tpu_custom_call.1} parent=0 // loop_header
    %s13 = sphi 0, %s17
    %p14 = scmp.ge.s32.totalorder %s13, 4
    %s23 = sphi 0, %s25
    %s26 = sphi 0, %s23
    %s27 = sphi 0, %s26
    %s43 = sphi 0, %s27
    %s47 = sphi 0, %s47
    %s49 = sphi 0, %s47
    %s50 = sphi 0, %s49
    %s64 = sphi 0, %s50
    %s68 = sphi 0, %s68
    %s70 = sphi 0, %s68
    %s71 = sphi 0, %s70
    %s85 = sphi 0, %s71
    %s89 = sphi 0, %s89
    %s91 = sphi 0, %s89
    %s92 = sphi 0, %s91
    %s106 = sphi 0, %s92
    %s110 = sphi 0, %s110
    %s112 = sphi 0, %s110
    %s113 = sphi 0, %s112
    %s127 = sphi 0, %s113
    %s131 = sphi 0, %s131
    %s133 = sphi 0, %s131
    %s134 = sphi 0, %s133
    %s148 = sphi 0, %s134
    %s152 = sphi 0, %s152
    %s154 = sphi 0, %s152
    %s155 = sphi 0, %s154
    %s169 = sphi 0, %s155
    %s175 = sphi 0, %s177
    %s178 = sphi 0, %s175
    %s179 = sphi 0, %s178
    %s195 = sphi 0, %s179
  $region4: #{tpu_custom_call.1} parent=0 // loop_header_branch
    %16 = sbr.rel (%p14) target = $region8
  $region5: #{tpu_custom_call.1} parent=0 // loop_body
    %s18 = ssub.s32 %s13, 1
    %s19 = ssub.s32 %s13, 2
    %s20 = sadd.s32 %s13, 1
    %s21 = ssub.s32 %s13, %s20
    %p22 = scmp.eq.s32.totalorder %s21, 0
    %s24 = sadd.s32 %s23, 1
    %s25 = scalar_select %p22, %s23, %s24
    %p28 = pneg %p22
    %p29 = scmp.eq.s32.totalorder %s13, 1
    %p30 = por %p28, %p29
    %p31 = scmp.ne.s32.totalorder %s23, %s26
    %p32 = scmp.eq.s32.totalorder %s13, 0
    %p33 = por %p31, %p32
    %p34 = scmp.ne.s32.totalorder %s23, %s26
    %p35 = scmp.eq.s32.totalorder %s18, 1
    %p36 = por %p34, %p35
    %p37 = scmp.ne.s32.totalorder %s26, %s27
    %p38 = scmp.eq.s32.totalorder %s18, 0
    %p39 = por %p37, %p38
    %p40 = scmp.ne.s32.totalorder %s26, %s27
    %p41 = scmp.eq.s32.totalorder %s19, 1
    %p42 = por %p40, %p41
    %p44 = scmp.ne.s32.totalorder %s27, %s43
    %p45 = scmp.eq.s32.totalorder %s19, 0
    %p46 = por %p44, %p45
    %s48 = sadd.s32 %s47, 1
    %p51 = scmp.eq.s32.totalorder %s13, 1
    %p52 = scmp.ne.s32.totalorder %s47, %s49
    %p53 = scmp.eq.s32.totalorder %s13, 0
    %p54 = por %p52, %p53
    %p55 = scmp.ne.s32.totalorder %s47, %s49
    %p56 = scmp.eq.s32.totalorder %s18, 1
    %p57 = por %p55, %p56
    %p58 = scmp.ne.s32.totalorder %s49, %s50
    %p59 = scmp.eq.s32.totalorder %s18, 0
    %p60 = por %p58, %p59
    %p61 = scmp.ne.s32.totalorder %s49, %s50
    %p62 = scmp.eq.s32.totalorder %s19, 1
    %p63 = por %p61, %p62
    %p65 = scmp.ne.s32.totalorder %s50, %s64
    %p66 = scmp.eq.s32.totalorder %s19, 0
    %p67 = por %p65, %p66
    %s69 = sadd.s32 %s68, 1
    %p72 = scmp.eq.s32.totalorder %s13, 1
    %p73 = scmp.ne.s32.totalorder %s68, %s70
    %p74 = scmp.eq.s32.totalorder %s13, 0
    %p75 = por %p73, %p74
    %p76 = scmp.ne.s32.totalorder %s68, %s70
    %p77 = scmp.eq.s32.totalorder %s18, 1
    %p78 = por %p76, %p77
    %p79 = scmp.ne.s32.totalorder %s70, %s71
    %p80 = scmp.eq.s32.totalorder %s18, 0
    %p81 = por %p79, %p80
    %p82 = scmp.ne.s32.totalorder %s70, %s71
    %p83 = scmp.eq.s32.totalorder %s19, 1
    %p84 = por %p82, %p83
    %p86 = scmp.ne.s32.totalorder %s71, %s85
    %p87 = scmp.eq.s32.totalorder %s19, 0
    %p88 = por %p86, %p87
    %s90 = sadd.s32 %s89, 1
    %p93 = scmp.eq.s32.totalorder %s13, 1
    %p94 = scmp.ne.s32.totalorder %s89, %s91
    %p95 = scmp.eq.s32.totalorder %s13, 0
    %p96 = por %p94, %p95
    %p97 = scmp.ne.s32.totalorder %s89, %s91
    %p98 = scmp.eq.s32.totalorder %s18, 1
    %p99 = por %p97, %p98
    %p100 = scmp.ne.s32.totalorder %s91, %s92
    %p101 = scmp.eq.s32.totalorder %s18, 0
    %p102 = por %p100, %p101
    %p103 = scmp.ne.s32.totalorder %s91, %s92
    %p104 = scmp.eq.s32.totalorder %s19, 1
    %p105 = por %p103, %p104
    %p107 = scmp.ne.s32.totalorder %s92, %s106
    %p108 = scmp.eq.s32.totalorder %s19, 0
    %p109 = por %p107, %p108
    %s111 = sadd.s32 %s110, 1
    %p114 = scmp.eq.s32.totalorder %s13, 1
    %p115 = scmp.ne.s32.totalorder %s110, %s112
    %p116 = scmp.eq.s32.totalorder %s13, 0
    %p117 = por %p115, %p116
    %p118 = scmp.ne.s32.totalorder %s110, %s112
    %p119 = scmp.eq.s32.totalorder %s18, 1
    %p120 = por %p118, %p119
    %p121 = scmp.ne.s32.totalorder %s112, %s113
    %p122 = scmp.eq.s32.totalorder %s18, 0
    %p123 = por %p121, %p122
    %p124 = scmp.ne.s32.totalorder %s112, %s113
    %p125 = scmp.eq.s32.totalorder %s19, 1
    %p126 = por %p124, %p125
    %p128 = scmp.ne.s32.totalorder %s113, %s127
    %p129 = scmp.eq.s32.totalorder %s19, 0
    %p130 = por %p128, %p129
    %s132 = sadd.s32 %s131, 1
    %p135 = scmp.eq.s32.totalorder %s13, 1
    %p136 = scmp.ne.s32.totalorder %s131, %s133
    %p137 = scmp.eq.s32.totalorder %s13, 0
    %p138 = por %p136, %p137
    %p139 = scmp.ne.s32.totalorder %s131, %s133
    %p140 = scmp.eq.s32.totalorder %s18, 1
    %p141 = por %p139, %p140
    %p142 = scmp.ne.s32.totalorder %s133, %s134
    %p143 = scmp.eq.s32.totalorder %s18, 0
    %p144 = por %p142, %p143
    %p145 = scmp.ne.s32.totalorder %s133, %s134
    %p146 = scmp.eq.s32.totalorder %s19, 1
    %p147 = por %p145, %p146
    %p149 = scmp.ne.s32.totalorder %s134, %s148
    %p150 = scmp.eq.s32.totalorder %s19, 0
    %p151 = por %p149, %p150
    %s153 = sadd.s32 %s152, 1
    %p156 = scmp.eq.s32.totalorder %s13, 1
    %p157 = scmp.ne.s32.totalorder %s152, %s154
    %p158 = scmp.eq.s32.totalorder %s13, 0
    %p159 = por %p157, %p158
    %p160 = scmp.ne.s32.totalorder %s152, %s154
    %p161 = scmp.eq.s32.totalorder %s18, 1
    %p162 = por %p160, %p161
    %p163 = scmp.ne.s32.totalorder %s154, %s155
    %p164 = scmp.eq.s32.totalorder %s18, 0
    %p165 = por %p163, %p164
    %p166 = scmp.ne.s32.totalorder %s154, %s155
    %p167 = scmp.eq.s32.totalorder %s19, 1
    %p168 = por %p166, %p167
    %p170 = scmp.ne.s32.totalorder %s155, %s169
    %p171 = scmp.eq.s32.totalorder %s19, 0
    %p172 = por %p170, %p171
    %s173 = ssub.s32 %s13, %s20
    %p174 = scmp.eq.s32.totalorder %s173, 0
    %s176 = sadd.s32 %s175, 1
    %s177 = scalar_select %p174, %s175, %s176
    %p180 = pneg %p174
    %p181 = scmp.eq.s32.totalorder %s13, 1
    %p182 = por %p180, %p181
    %p183 = scmp.ne.s32.totalorder %s175, %s178
    %p184 = scmp.eq.s32.totalorder %s13, 0
    %p185 = por %p183, %p184
    %p186 = scmp.ne.s32.totalorder %s175, %s178
    %p187 = scmp.eq.s32.totalorder %s18, 1
    %p188 = por %p186, %p187
    %p189 = scmp.ne.s32.totalorder %s178, %s179
    %p190 = scmp.eq.s32.totalorder %s18, 0
    %p191 = por %p189, %p190
    %p192 = scmp.ne.s32.totalorder %s178, %s179
    %p193 = scmp.eq.s32.totalorder %s19, 1
    %p194 = por %p192, %p193
    %p196 = scmp.ne.s32.totalorder %s179, %s195
    %p197 = scmp.eq.s32.totalorder %s19, 0
    %p198 = por %p196, %p197
    %p199 = scmp.le.s32.totalorder 1, %s13
    %p200 = scmp.lt.s32.totalorder %s13, 3
    %p201 = pnand %p199, %p200
    %p202 = pneg %p201
    // Predicated region
    $region9: #{tpu_custom_call.1} parent=5 // pred_check
      _
    $region10: #{tpu_custom_call.1} parent=5 // pred_check_branch
      %204 = sbr.rel (%p201) target = $region12
    $region11: #{tpu_custom_call.1} parent=5 // pred_region
      %s205 = ssub.s32 %s13, 1
      // Predicated region
      $region13: #{tpu_custom_call.1} parent=11 // pred_check
        %p206 = pneg %p60
      $region14: #{tpu_custom_call.1} parent=11 // pred_check_branch
        %208 = sbr.rel (%p206) target = $region16
      $region15: #{tpu_custom_call.1} parent=11 // pred_region
        _
      $region16: #{tpu_custom_call.1} parent=11 // pred_fallthru
        _
      // Predicated region
      $region17: #{tpu_custom_call.1} parent=11 // pred_check
        %p209 = pneg %p81
      $region18: #{tpu_custom_call.1} parent=11 // pred_check_branch
        %211 = sbr.rel (%p209) target = $region20
      $region19: #{tpu_custom_call.1} parent=11 // pred_region
        _
      $region20: #{tpu_custom_call.1} parent=11 // pred_fallthru
        _
      // Predicated region
      $region21: #{tpu_custom_call.1} parent=11 // pred_check
        %p212 = pneg %p102
      $region22: #{tpu_custom_call.1} parent=11 // pred_check_branch
        %214 = sbr.rel (%p212) target = $region24
      $region23: #{tpu_custom_call.1} parent=11 // pred_region
        _
      $region24: #{tpu_custom_call.1} parent=11 // pred_fallthru
        _
      // Predicated region
      $region25: #{tpu_custom_call.1} parent=11 // pred_check
        %p215 = pneg %p123
      $region26: #{tpu_custom_call.1} parent=11 // pred_check_branch
        %217 = sbr.rel (%p215) target = $region28
      $region27: #{tpu_custom_call.1} parent=11 // pred_region
        _
      $region28: #{tpu_custom_call.1} parent=11 // pred_fallthru
        _
      // Predicated region
      $region29: #{tpu_custom_call.1} parent=11 // pred_check
        %p218 = pneg %p144
      $region30: #{tpu_custom_call.1} parent=11 // pred_check_branch
        %220 = sbr.rel (%p218) target = $region32
      $region31: #{tpu_custom_call.1} parent=11 // pred_region
        _
      $region32: #{tpu_custom_call.1} parent=11 // pred_fallthru
        _
      // Predicated region
      $region33: #{tpu_custom_call.1} parent=11 // pred_check
        %p221 = pneg %p165
      $region34: #{tpu_custom_call.1} parent=11 // pred_check_branch
        %223 = sbr.rel (%p221) target = $region36
      $region35: #{tpu_custom_call.1} parent=11 // pred_region
        _
      $region36: #{tpu_custom_call.1} parent=11 // pred_fallthru
        _
    $region12: #{tpu_custom_call.1} parent=5 // pred_fallthru
      _
    %p224 = scmp.lt.s32.totalorder %s13, 2
    // Predicated region
    $region37: #{tpu_custom_call.1} parent=5 // pred_check
      %p225 = pneg %p224
    $region38: #{tpu_custom_call.1} parent=5 // pred_check_branch
      %227 = sbr.rel (%p225) target = $region40
    $region39: #{tpu_custom_call.1} parent=5 // pred_region
      // Predicated region
      $region41: #{tpu_custom_call.1} parent=39 // pred_check
        %p228 = pneg %p33
      $region42: #{tpu_custom_call.1} parent=39 // pred_check_branch
        %230 = sbr.rel (%p228) target = $region44
      $region43: #{tpu_custom_call.1} parent=39 // pred_region
        %s231 = smul.u32 4, %s13
        %p232 = scmp.lt.s32.totalorder %s231, 7
        %s233 = scalar_select %p232, %s231, 7
        %s234 = smul.addr %s233, 8
        %s235 = scalar_lea.vmem %s0, %s234
        %s236 = smul.u32 4, %s13
      $region44: #{tpu_custom_call.1} parent=39 // pred_fallthru
        _
    $region40: #{tpu_custom_call.1} parent=5 // pred_fallthru
      _
    %p237 = scmp.le.s32.totalorder 1, %s13
    %p238 = scmp.lt.s32.totalorder %s13, 3
    %p239 = pnand %p237, %p238
    %p240 = pneg %p239
    // Predicated region
    $region45: #{tpu_custom_call.1} parent=5 // pred_check
      _
    $region46: #{tpu_custom_call.1} parent=5 // pred_check_branch
      %242 = sbr.rel (%p239) target = $region48
    $region47: #{tpu_custom_call.1} parent=5 // pred_region
      %s243 = ssub.s32 %s13, 1
      %s244 = smul.u32 4, %s18
      %p245 = scmp.lt.s32.totalorder %s244, 7
      %s246 = scalar_select %p245, %s244, 7
      %s247 = smul.addr %s246, 8
      %s248 = scalar_lea.vmem %s0, %s247
      %p249 = pneg %p39
      %p250 = pneg %p36
      %p251 = pneg %p60
      %p252 = pneg %p57
      %p253 = pneg %p81
      %p254 = pneg %p78
      %p255 = pneg %p102
      %p256 = pneg %p99
      %p257 = pneg %p123
      %p258 = pneg %p120
      %p259 = pneg %p144
      %p260 = pneg %p141
      %p261 = pneg %p165
      %p262 = pneg %p162
      %p263 = pneg %p191
      %p264 = pneg %p188
      %s265 = smul.u32 4, %s18
      %p266 = scmp.lt.s32.totalorder %s265, 7
      %s267 = scalar_select %p266, %s265, 7
      %s268 = smul.addr %s267, 8
      %s269 = scalar_lea.vmem %s7, %s268
      %s270 = smul.u32 4, %s18
      %p271 = scmp.lt.s32.totalorder %s270, 7
      %s272 = scalar_select %p271, %s270, 7
      %s273 = smul.addr %s272, 8
      %s274 = scalar_lea.vmem %s0, %s273
      %s275 = smul.u32 4, %s18
      %s276 = smul.u32 4, %s18
      %p277 = scmp.lt.s32.totalorder %s276, 7
      %s278 = scalar_select %p277, %s276, 7
      %s279 = smul.addr %s278, 8
      %s280 = scalar_lea.vmem %s7, %s279
      %s281 = smul.u32 4, %s18
      %v282 = vld [vmem:[%s274] sm:$0xff]
      %v283 = vld [vmem:[%s274 + $0x8] sm:$0xff]
      %v284 = vld [vmem:[%s274 + $0x10] sm:$0xff]
      %v285 = vld [vmem:[%s274 + $0x18] sm:$0xff]
      %v286 = vld [vmem:[%s1] sm:$0xff]
      %v287 = vld [vmem:[%s1 + $0x8] sm:$0xff]
      %v288 = vld [vmem:[%s1 + $0x10] sm:$0xff]
      %v289 = vld [vmem:[%s1 + $0x18] sm:$0xff]
      %v290 = vld [vmem:[%s2] sm:$0x1]
      %v292 = vperm.slane %v290, 0
      %vm294 = vcmask 261120
      %v296 = vsel %vm294, %v282, 0
      %v299 = vsel %vm294, %v283, 0
      %v302 = vsel %vm294, %v284, 0
      %v305 = vsel %vm294, %v285, 0
      %307 = vmatpush.msra.mxu0 0.0
      %308 = vmatpush.msra.mxu0 0.0
      %309 = vmatpush.msra.mxu0 0.0
      %310 = vmatpush.msra.mxu0 0.0
      %311 = vmatpush.msra.mxu0 0.0
      %312 = vmatpush.msra.mxu0 0.0
      %313 = vmatpush.msra.mxu0 0.0
      %314 = vmatpush.msra.mxu0 0.0
      %315 = vmatpush.msra.mxu0 0.0
      %316 = vmatpush.msra.mxu0 0.0
      %317 = vmatpush.msra.mxu0 0.0
      %318 = vmatpush.msra.mxu0 0.0
      %319 = vmatpush.msra.mxu0 %v289
      %320 = vmatpush.msra.mxu0 %v288
      %321 = vmatpush.msra.mxu0 %v287
      %322 = vmatpush.msra.mxu0 %v286
      %323 = vmatmul.f32.gmra.mxu0 %v296
      %v324 = vpop.f32.mrf.mxu0
      %v325 = vadd.f32 %v292, %v324
      %326 = vmatmul.f32.gmra.mxu0 %v299
      %v327 = vpop.f32.mrf.mxu0
      %v328 = vadd.f32 %v292, %v327
      %329 = vmatmul.f32.gmra.mxu0 %v302
      %v330 = vpop.f32.mrf.mxu0
      %v331 = vadd.f32 %v292, %v330
      %332 = vmatmul.f32.gmra.mxu0 %v305
      %v333 = vpop.f32.mrf.mxu0
      %v334 = vadd.f32 %v292, %v333
      %335 = vdwg.mxu0
      %v336 = vmul.f32 %v325, 1.702
      %v337 = vmul.f32 %v328, 1.702
      %v338 = vmul.f32 %v331, 1.702
      %v339 = vmul.f32 %v334, 1.702
      %v340 = vxor.u32 %v336, 2147483648
      %v341 = vxor.u32 %v337, 2147483648
      %v342 = vxor.u32 %v338, 2147483648
      %v343 = vxor.u32 %v339, 2147483648
      %v344 = vmul.f32 %v340, 1.442695
      %v345 = vpow.pop %v344
      %v346 = vmul.f32 %v341, 1.442695
      %v347 = vpow.pop %v346
      %v348 = vmul.f32 %v342, 1.442695
      %v349 = vpow.pop %v348
      %v350 = vmul.f32 %v343, 1.442695
      %v351 = vpow.pop %v350
      %v352 = vadd.f32 %v345, 1.0
      %v353 = vadd.f32 %v347, 1.0
      %v354 = vadd.f32 %v349, 1.0
      %v355 = vadd.f32 %v351, 1.0
      %v356 = vrcp.pop %v352
      %v357 = vmul.f32 %v352, %v356
      %v358 = vsub.f32 1.0, %v357
      %v359 = vmul.f32 %v356, %v358
      %v360 = vadd.f32 %v356, %v359
      %vm361 = vweird.f32 %v352
      %vm362 = vweird.f32 %v356
      %vm363 = vmor %vm361, %vm362
      %v364 = vsel %vm363, %v356, %v360
      %v365 = vand.u32 2147483647, %v352
      %vm366 = vcmp.eq.f32.partialorder %v365, 8.507059e+37
      %v367 = vand.u32 %v352, 2147483648
      %v368 = vor.u32 1.1754944e-38, %v367
      %v369 = vsel %vm366, %v368, %v364
      %v370 = vmul.f32 1.0, %v369
      %v371 = vrcp.pop %v353
      %v372 = vmul.f32 %v353, %v371
      %v373 = vsub.f32 1.0, %v372
      %v374 = vmul.f32 %v371, %v373
      %v375 = vadd.f32 %v371, %v374
      %vm376 = vweird.f32 %v353
      %vm377 = vweird.f32 %v371
      %vm378 = vmor %vm376, %vm377
      %v379 = vsel %vm378, %v371, %v375
      %v380 = vand.u32 2147483647, %v353
      %vm381 = vcmp.eq.f32.partialorder %v380, 8.507059e+37
      %v382 = vand.u32 %v353, 2147483648
      %v383 = vor.u32 1.1754944e-38, %v382
      %v384 = vsel %vm381, %v383, %v379
      %v385 = vmul.f32 1.0, %v384
      %v386 = vrcp.pop %v354
      %v387 = vmul.f32 %v354, %v386
      %v388 = vsub.f32 1.0, %v387
      %v389 = vmul.f32 %v386, %v388
      %v390 = vadd.f32 %v386, %v389
      %vm391 = vweird.f32 %v354
      %vm392 = vweird.f32 %v386
      %vm393 = vmor %vm391, %vm392
      %v394 = vsel %vm393, %v386, %v390
      %v395 = vand.u32 2147483647, %v354
      %vm396 = vcmp.eq.f32.partialorder %v395, 8.507059e+37
      %v397 = vand.u32 %v354, 2147483648
      %v398 = vor.u32 1.1754944e-38, %v397
      %v399 = vsel %vm396, %v398, %v394
      %v400 = vmul.f32 1.0, %v399
      %v401 = vrcp.pop %v355
      %v402 = vmul.f32 %v355, %v401
      %v403 = vsub.f32 1.0, %v402
      %v404 = vmul.f32 %v401, %v403
      %v405 = vadd.f32 %v401, %v404
      %vm406 = vweird.f32 %v355
      %vm407 = vweird.f32 %v401
      %vm408 = vmor %vm406, %vm407
      %v409 = vsel %vm408, %v401, %v405
      %v410 = vand.u32 2147483647, %v355
      %vm411 = vcmp.eq.f32.partialorder %v410, 8.507059e+37
      %v412 = vand.u32 %v355, 2147483648
      %v413 = vor.u32 1.1754944e-38, %v412
      %v414 = vsel %vm411, %v413, %v409
      %v415 = vmul.f32 1.0, %v414
      %v416 = vmul.f32 %v325, %v370
      %v417 = vmul.f32 %v328, %v385
      %v418 = vmul.f32 %v331, %v400
      %v419 = vmul.f32 %v334, %v415
      %v420 = vlaneseq
      %v421 = vshrl.u32 %v420, 7
      %v422 = vadd.s32 %v421, 8
      %v423 = vadd.s32 %v421, 16
      %v424 = vadd.s32 %v421, 24
      %vm425 = vcmp.lt.s32.totalorder %v421, 0
      %v426 = vsub.s32 0, %v421
      %v427 = vsel %vm425, %v426, %v421
      %v428 = vshrl.u32 %v427, 4
      %v429 = vand.u32 %v427, 15
      %v430 = vsub.s32 0, %v429
      %v431 = vsel %vm425, %v430, %v429
      %vm432 = vcmp.lt.s32.totalorder %v422, 0
      %v433 = vsub.s32 0, %v422
      %v434 = vsel %vm432, %v433, %v422
      %v435 = vshrl.u32 %v434, 4
      %v436 = vand.u32 %v434, 15
      %v437 = vsub.s32 0, %v436
      %v438 = vsel %vm432, %v437, %v436
      %vm439 = vcmp.lt.s32.totalorder %v423, 0
      %v440 = vsub.s32 0, %v423
      %v441 = vsel %vm439, %v440, %v423
      %v442 = vshrl.u32 %v441, 4
      %v443 = vand.u32 %v441, 15
      %v444 = vsub.s32 0, %v443
      %v445 = vsel %vm439, %v444, %v443
      %vm446 = vcmp.lt.s32.totalorder %v424, 0
      %v447 = vsub.s32 0, %v424
      %v448 = vsel %vm446, %v447, %v424
      %v449 = vshrl.u32 %v448, 4
      %v450 = vand.u32 %v448, 15
      %v451 = vsub.s32 0, %v450
      %v452 = vsel %vm446, %v451, %v450
      %vm453 = vcmp.ne.s32.totalorder %v431, 0
      %vm454 = vcmp.ne.s32.totalorder %v438, 0
      %vm455 = vcmp.ne.s32.totalorder %v445, 0
      %vm456 = vcmp.ne.s32.totalorder %v452, 0
      %vm457 = vcmp.lt.s32.totalorder %v431, 0
      %vm458 = vcmp.lt.s32.totalorder %v438, 0
      %vm459 = vcmp.lt.s32.totalorder %v445, 0
      %vm460 = vcmp.lt.s32.totalorder %v452, 0
      %vm461 = vmand %vm457, %vm453
      %vm462 = vmand %vm458, %vm454
      %vm463 = vmand %vm459, %vm455
      %vm464 = vmand %vm460, %vm456
      %v465 = vadd.s32 %v431, 16
      %v466 = vadd.s32 %v438, 16
      %v467 = vadd.s32 %v445, 16
      %v468 = vadd.s32 %v452, 16
      %v469 = vsel %vm461, %v465, %v431
      %v470 = vsel %vm462, %v466, %v438
      %v471 = vsel %vm463, %v467, %v445
      %v472 = vsel %vm464, %v468, %v452
      %vm473 = vcmp.lt.s32.totalorder %v421, 0
      %v474 = vsub.s32 0, %v421
      %v475 = vsel %vm473, %v474, %v421
      %v476 = vshrl.u32 %v475, 2
      %v477 = vand.u32 %v475, 3
      %v478 = vsub.s32 0, %v477
      %v479 = vsel %vm473, %v478, %v477
      %vm480 = vcmp.lt.s32.totalorder %v422, 0
      %v481 = vsub.s32 0, %v422
      %v482 = vsel %vm480, %v481, %v422
      %v483 = vshrl.u32 %v482, 2
      %v484 = vand.u32 %v482, 3
      %v485 = vsub.s32 0, %v484
      %v486 = vsel %vm480, %v485, %v484
      %vm487 = vcmp.lt.s32.totalorder %v423, 0
      %v488 = vsub.s32 0, %v423
      %v489 = vsel %vm487, %v488, %v423
      %v490 = vshrl.u32 %v489, 2
      %v491 = vand.u32 %v489, 3
      %v492 = vsub.s32 0, %v491
      %v493 = vsel %vm487, %v492, %v491
      %vm494 = vcmp.lt.s32.totalorder %v424, 0
      %v495 = vsub.s32 0, %v424
      %v496 = vsel %vm494, %v495, %v424
      %v497 = vshrl.u32 %v496, 2
      %v498 = vand.u32 %v496, 3
      %v499 = vsub.s32 0, %v498
      %v500 = vsel %vm494, %v499, %v498
      %vm501 = vcmp.ne.s32.totalorder %v479, 0
      %vm502 = vcmp.ne.s32.totalorder %v486, 0
      %vm503 = vcmp.ne.s32.totalorder %v493, 0
      %vm504 = vcmp.ne.s32.totalorder %v500, 0
      %vm505 = vcmp.lt.s32.totalorder %v479, 0
      %vm506 = vcmp.lt.s32.totalorder %v486, 0
      %vm507 = vcmp.lt.s32.totalorder %v493, 0
      %vm508 = vcmp.lt.s32.totalorder %v500, 0
      %vm509 = vmand %vm505, %vm501
      %vm510 = vmand %vm506, %vm502
      %vm511 = vmand %vm507, %vm503
      %vm512 = vmand %vm508, %vm504
      %v513 = vadd.s32 %v479, 4
      %v514 = vadd.s32 %v486, 4
      %v515 = vadd.s32 %v493, 4
      %v516 = vadd.s32 %v500, 4
      %v517 = vsel %vm509, %v513, %v479
      %v518 = vsel %vm510, %v514, %v486
      %v519 = vsel %vm511, %v515, %v493
      %v520 = vsel %vm512, %v516, %v500
      %v522 = vrot.slane %v419, 3
      %vm527 = vcmask 1044480
      %v528 = vrot.slane %v416, 3
      %v529 = vrot.slane %v417, 3
      %v530 = vsel %vm527, %v528, %v529
      %v531 = vrot.slane %v418, 3
      %v532 = vsel %vm527, %v529, %v531
      %v533 = vsel %vm527, %v531, %v522
      %v538 = vsel %vm527, %v522, %v528
      %v539 = vadd.s32 %v517, 4294967295
      %v540 = vadd.s32 %v518, 4294967295
      %v541 = vadd.s32 %v519, 4294967295
      %v542 = vadd.s32 %v520, 4294967295
      %v543 = vadd.s32 %v469, 4294967291
      %v544 = vadd.s32 %v470, 4294967291
      %v545 = vadd.s32 %v471, 4294967291
      %v546 = vadd.s32 %v472, 4294967291
      %vm547 = vcmp.ge.s32.totalorder %v539, 0
      %vm548 = vcmp.ge.s32.totalorder %v540, 0
      %vm549 = vcmp.ge.s32.totalorder %v541, 0
      %vm550 = vcmp.ge.s32.totalorder %v542, 0
      %vm551 = vcmp.lt.s32.totalorder %v539, 4
      %vm552 = vcmp.lt.s32.totalorder %v540, 4
      %vm553 = vcmp.lt.s32.totalorder %v541, 4
      %vm554 = vcmp.lt.s32.totalorder %v542, 4
      %vm555 = vmand %vm547, %vm551
      %vm556 = vmand %vm548, %vm552
      %vm557 = vmand %vm549, %vm553
      %vm558 = vmand %vm550, %vm554
      %vm559 = vcmp.ge.s32.totalorder %v543, 0
      %vm560 = vcmp.ge.s32.totalorder %v544, 0
      %vm561 = vcmp.ge.s32.totalorder %v545, 0
      %vm562 = vcmp.ge.s32.totalorder %v546, 0
      %vm563 = vmand %vm555, %vm559
      %vm564 = vmand %vm556, %vm560
      %vm565 = vmand %vm557, %vm561
      %vm566 = vmand %vm558, %vm562
      %vm567 = vcmp.lt.s32.totalorder %v543, 16
      %vm568 = vcmp.lt.s32.totalorder %v544, 16
      %vm569 = vcmp.lt.s32.totalorder %v545, 16
      %vm570 = vcmp.lt.s32.totalorder %v546, 16
      %vm571 = vmand %vm563, %vm567
      %vm572 = vmand %vm564, %vm568
      %vm573 = vmand %vm565, %vm569
      %vm574 = vmand %vm566, %vm570
      %v575 = vsel %vm571, 1, 0
      %v576 = vsel %vm572, 1, 0
      %v577 = vsel %vm573, 1, 0
      %v578 = vsel %vm574, 1, 0
      %v579 = vcvt.s32.f32 %v575
      %v580 = vcvt.s32.f32 %v576
      %v581 = vcvt.s32.f32 %v577
      %v582 = vcvt.s32.f32 %v578
      %v583 = vmul.f32 %v538, %v579
      %v584 = vmul.f32 %v530, %v580
      %v585 = vmul.f32 %v532, %v581
      %v586 = vmul.f32 %v533, %v582
      %v587 = vrot.slane %v419, 4
      %vm589 = vcmask 1043456
      %v590 = vrot.slane %v416, 4
      %v591 = vrot.slane %v417, 4
      %v592 = vsel %vm589, %v590, %v591
      %v593 = vrot.slane %v418, 4
      %v594 = vsel %vm589, %v591, %v593
      %v595 = vsel %vm589, %v593, %v587
      %v600 = vsel %vm589, %v587, %v590
      %v601 = vadd.s32 %v469, 4294967292
      %v602 = vadd.s32 %v470, 4294967292
      %v603 = vadd.s32 %v471, 4294967292
      %v604 = vadd.s32 %v472, 4294967292
      %vm605 = vcmp.ge.s32.totalorder %v517, 0
      %vm606 = vcmp.ge.s32.totalorder %v518, 0
      %vm607 = vcmp.ge.s32.totalorder %v519, 0
      %vm608 = vcmp.ge.s32.totalorder %v520, 0
      %vm609 = vcmp.lt.s32.totalorder %v517, 4
      %vm610 = vcmp.lt.s32.totalorder %v518, 4
      %vm611 = vcmp.lt.s32.totalorder %v519, 4
      %vm612 = vcmp.lt.s32.totalorder %v520, 4
      %vm613 = vmand %vm605, %vm609
      %vm614 = vmand %vm606, %vm610
      %vm615 = vmand %vm607, %vm611
      %vm616 = vmand %vm608, %vm612
      %vm617 = vcmp.ge.s32.totalorder %v601, 0
      %vm618 = vcmp.ge.s32.totalorder %v602, 0
      %vm619 = vcmp.ge.s32.totalorder %v603, 0
      %vm620 = vcmp.ge.s32.totalorder %v604, 0
      %vm621 = vmand %vm613, %vm617
      %vm622 = vmand %vm614, %vm618
      %vm623 = vmand %vm615, %vm619
      %vm624 = vmand %vm616, %vm620
      %vm625 = vcmp.lt.s32.totalorder %v601, 16
      %vm626 = vcmp.lt.s32.totalorder %v602, 16
      %vm627 = vcmp.lt.s32.totalorder %v603, 16
      %vm628 = vcmp.lt.s32.totalorder %v604, 16
      %vm629 = vmand %vm621, %vm625
      %vm630 = vmand %vm622, %vm626
      %vm631 = vmand %vm623, %vm627
      %vm632 = vmand %vm624, %vm628
      %v633 = vsel %vm629, 1, 0
      %v634 = vsel %vm630, 1, 0
      %v635 = vsel %vm631, 1, 0
      %v636 = vsel %vm632, 1, 0
      %v637 = vcvt.s32.f32 %v633
      %v638 = vcvt.s32.f32 %v634
      %v639 = vcvt.s32.f32 %v635
      %v640 = vcvt.s32.f32 %v636
      %v641 = vmul.f32 %v600, %v637
      %v642 = vmul.f32 %v592, %v638
      %v643 = vmul.f32 %v594, %v639
      %v644 = vmul.f32 %v595, %v640
      %v645 = vrot.slane %v419, 5
      %vm647 = vcmask 1042432
      %v648 = vrot.slane %v416, 5
      %v649 = vrot.slane %v417, 5
      %v650 = vsel %vm647, %v648, %v649
      %v651 = vrot.slane %v418, 5
      %v652 = vsel %vm647, %v649, %v651
      %v653 = vsel %vm647, %v651, %v645
      %v658 = vsel %vm647, %v645, %v648
      %v659 = vadd.s32 %v517, 1
      %v660 = vadd.s32 %v518, 1
      %v661 = vadd.s32 %v519, 1
      %v662 = vadd.s32 %v520, 1
      %v663 = vadd.s32 %v469, 4294967293
      %v664 = vadd.s32 %v470, 4294967293
      %v665 = vadd.s32 %v471, 4294967293
      %v666 = vadd.s32 %v472, 4294967293
      %vm667 = vcmp.ge.s32.totalorder %v659, 0
      %vm668 = vcmp.ge.s32.totalorder %v660, 0
      %vm669 = vcmp.ge.s32.totalorder %v661, 0
      %vm670 = vcmp.ge.s32.totalorder %v662, 0
      %vm671 = vcmp.lt.s32.totalorder %v659, 4
      %vm672 = vcmp.lt.s32.totalorder %v660, 4
      %vm673 = vcmp.lt.s32.totalorder %v661, 4
      %vm674 = vcmp.lt.s32.totalorder %v662, 4
      %vm675 = vmand %vm667, %vm671
      %vm676 = vmand %vm668, %vm672
      %vm677 = vmand %vm669, %vm673
      %vm678 = vmand %vm670, %vm674
      %vm679 = vcmp.ge.s32.totalorder %v663, 0
      %vm680 = vcmp.ge.s32.totalorder %v664, 0
      %vm681 = vcmp.ge.s32.totalorder %v665, 0
      %vm682 = vcmp.ge.s32.totalorder %v666, 0
      %vm683 = vmand %vm675, %vm679
      %vm684 = vmand %vm676, %vm680
      %vm685 = vmand %vm677, %vm681
      %vm686 = vmand %vm678, %vm682
      %vm687 = vcmp.lt.s32.totalorder %v663, 16
      %vm688 = vcmp.lt.s32.totalorder %v664, 16
      %vm689 = vcmp.lt.s32.totalorder %v665, 16
      %vm690 = vcmp.lt.s32.totalorder %v666, 16
      %vm691 = vmand %vm683, %vm687
      %vm692 = vmand %vm684, %vm688
      %vm693 = vmand %vm685, %vm689
      %vm694 = vmand %vm686, %vm690
      %v695 = vsel %vm691, 1, 0
      %v696 = vsel %vm692, 1, 0
      %v697 = vsel %vm693, 1, 0
      %v698 = vsel %vm694, 1, 0
      %v699 = vcvt.s32.f32 %v695
      %v700 = vcvt.s32.f32 %v696
      %v701 = vcvt.s32.f32 %v697
      %v702 = vcvt.s32.f32 %v698
      %v703 = vmul.f32 %v658, %v699
      %v704 = vmul.f32 %v650, %v700
      %v705 = vmul.f32 %v652, %v701
      %v706 = vmul.f32 %v653, %v702
      %v707 = vrot.slane %v419, 7
      %vm709 = vcmask 1040384
      %v710 = vrot.slane %v416, 7
      %v711 = vrot.slane %v417, 7
      %v712 = vsel %vm709, %v710, %v711
      %v713 = vrot.slane %v418, 7
      %v714 = vsel %vm709, %v711, %v713
      %v715 = vsel %vm709, %v713, %v707
      %v720 = vsel %vm709, %v707, %v710
      %v721 = vadd.s32 %v469, 4294967295
      %v722 = vadd.s32 %v470, 4294967295
      %v723 = vadd.s32 %v471, 4294967295
      %v724 = vadd.s32 %v472, 4294967295
      %vm725 = vcmp.ge.s32.totalorder %v721, 0
      %vm726 = vcmp.ge.s32.totalorder %v722, 0
      %vm727 = vcmp.ge.s32.totalorder %v723, 0
      %vm728 = vcmp.ge.s32.totalorder %v724, 0
      %vm729 = vmand %vm555, %vm725
      %vm730 = vmand %vm556, %vm726
      %vm731 = vmand %vm557, %vm727
      %vm732 = vmand %vm558, %vm728
      %vm733 = vcmp.lt.s32.totalorder %v721, 16
      %vm734 = vcmp.lt.s32.totalorder %v722, 16
      %vm735 = vcmp.lt.s32.totalorder %v723, 16
      %vm736 = vcmp.lt.s32.totalorder %v724, 16
      %vm737 = vmand %vm729, %vm733
      %vm738 = vmand %vm730, %vm734
      %vm739 = vmand %vm731, %vm735
      %vm740 = vmand %vm732, %vm736
      %v741 = vsel %vm737, 1, 0
      %v742 = vsel %vm738, 1, 0
      %v743 = vsel %vm739, 1, 0
      %v744 = vsel %vm740, 1, 0
      %v745 = vcvt.s32.f32 %v741
      %v746 = vcvt.s32.f32 %v742
      %v747 = vcvt.s32.f32 %v743
      %v748 = vcvt.s32.f32 %v744
      %v749 = vmul.f32 %v720, %v745
      %v750 = vmul.f32 %v712, %v746
      %v751 = vmul.f32 %v714, %v747
      %v752 = vmul.f32 %v715, %v748
      %vm753 = vcmask 1046528
      %v754 = vrot.slane %v416, 1
      %v755 = vrot.slane %v417, 1
      %v756 = vsel %vm753, %v754, %v755
      %v757 = vrot.slane %v418, 1
      %v758 = vsel %vm753, %v755, %v757
      %v759 = vrot.slane %v419, 1
      %v760 = vsel %vm753, %v757, %v759
      %v766 = vsel %vm753, %v759, %v754
      %v767 = vadd.s32 %v469, 1
      %v768 = vadd.s32 %v470, 1
      %v769 = vadd.s32 %v471, 1
      %v770 = vadd.s32 %v472, 1
      %vm771 = vcmp.ge.s32.totalorder %v767, 0
      %vm772 = vcmp.ge.s32.totalorder %v768, 0
      %vm773 = vcmp.ge.s32.totalorder %v769, 0
      %vm774 = vcmp.ge.s32.totalorder %v770, 0
      %vm775 = vmand %vm675, %vm771
      %vm776 = vmand %vm676, %vm772
      %vm777 = vmand %vm677, %vm773
      %vm778 = vmand %vm678, %vm774
      %vm779 = vcmp.lt.s32.totalorder %v767, 16
      %vm780 = vcmp.lt.s32.totalorder %v768, 16
      %vm781 = vcmp.lt.s32.totalorder %v769, 16
      %vm782 = vcmp.lt.s32.totalorder %v770, 16
      %vm783 = vmand %vm775, %vm779
      %vm784 = vmand %vm776, %vm780
      %vm785 = vmand %vm777, %vm781
      %vm786 = vmand %vm778, %vm782
      %v787 = vsel %vm783, 1, 0
      %v788 = vsel %vm784, 1, 0
      %v789 = vsel %vm785, 1, 0
      %v790 = vsel %vm786, 1, 0
      %v791 = vcvt.s32.f32 %v787
      %v792 = vcvt.s32.f32 %v788
      %v793 = vcvt.s32.f32 %v789
      %v794 = vcvt.s32.f32 %v790
      %v795 = vmul.f32 %v756, %v791
      %v796 = vmul.f32 %v758, %v792
      %v797 = vmul.f32 %v760, %v793
      %v798 = vmul.f32 %v766, %v794
      %v799 = vadd.s32 %v469, 3
      %v800 = vadd.s32 %v470, 3
      %v801 = vadd.s32 %v471, 3
      %v802 = vadd.s32 %v472, 3
      %vm803 = vcmp.ge.s32.totalorder %v799, 0
      %vm804 = vcmp.ge.s32.totalorder %v800, 0
      %vm805 = vcmp.ge.s32.totalorder %v801, 0
      %vm806 = vcmp.ge.s32.totalorder %v802, 0
      %vm807 = vmand %vm555, %vm803
      %vm808 = vmand %vm556, %vm804
      %vm809 = vmand %vm557, %vm805
      %vm810 = vmand %vm558, %vm806
      %vm811 = vcmp.lt.s32.totalorder %v799, 16
      %vm812 = vcmp.lt.s32.totalorder %v800, 16
      %vm813 = vcmp.lt.s32.totalorder %v801, 16
      %vm814 = vcmp.lt.s32.totalorder %v802, 16
      %vm815 = vmand %vm807, %vm811
      %vm816 = vmand %vm808, %vm812
      %vm817 = vmand %vm809, %vm813
      %vm818 = vmand %vm810, %vm814
      %v819 = vsel %vm815, 1, 0
      %v820 = vsel %vm816, 1, 0
      %v821 = vsel %vm817, 1, 0
      %v822 = vsel %vm818, 1, 0
      %v823 = vcvt.s32.f32 %v819
      %v824 = vcvt.s32.f32 %v820
      %v825 = vcvt.s32.f32 %v821
      %v826 = vcvt.s32.f32 %v822
      %v827 = vmul.f32 %v530, %v823
      %v828 = vmul.f32 %v532, %v824
      %v829 = vmul.f32 %v533, %v825
      %v830 = vmul.f32 %v538, %v826
      %v831 = vadd.s32 %v469, 4
      %v832 = vadd.s32 %v470, 4
      %v833 = vadd.s32 %v471, 4
      %v834 = vadd.s32 %v472, 4
      %vm835 = vcmp.ge.s32.totalorder %v831, 0
      %vm836 = vcmp.ge.s32.totalorder %v832, 0
      %vm837 = vcmp.ge.s32.totalorder %v833, 0
      %vm838 = vcmp.ge.s32.totalorder %v834, 0
      %vm839 = vmand %vm613, %vm835
      %vm840 = vmand %vm614, %vm836
      %vm841 = vmand %vm615, %vm837
      %vm842 = vmand %vm616, %vm838
      %vm843 = vcmp.lt.s32.totalorder %v831, 16
      %vm844 = vcmp.lt.s32.totalorder %v832, 16
      %vm845 = vcmp.lt.s32.totalorder %v833, 16
      %vm846 = vcmp.lt.s32.totalorder %v834, 16
      %vm847 = vmand %vm839, %vm843
      %vm848 = vmand %vm840, %vm844
      %vm849 = vmand %vm841, %vm845
      %vm850 = vmand %vm842, %vm846
      %v851 = vsel %vm847, 1, 0
      %v852 = vsel %vm848, 1, 0
      %v853 = vsel %vm849, 1, 0
      %v854 = vsel %vm850, 1, 0
      %v855 = vcvt.s32.f32 %v851
      %v856 = vcvt.s32.f32 %v852
      %v857 = vcvt.s32.f32 %v853
      %v858 = vcvt.s32.f32 %v854
      %v859 = vmul.f32 %v592, %v855
      %v860 = vmul.f32 %v594, %v856
      %v861 = vmul.f32 %v595, %v857
      %v862 = vmul.f32 %v600, %v858
      %v863 = vadd.s32 %v469, 5
      %v864 = vadd.s32 %v470, 5
      %v865 = vadd.s32 %v471, 5
      %v866 = vadd.s32 %v472, 5
      %vm867 = vcmp.ge.s32.totalorder %v863, 0
      %vm868 = vcmp.ge.s32.totalorder %v864, 0
      %vm869 = vcmp.ge.s32.totalorder %v865, 0
      %vm870 = vcmp.ge.s32.totalorder %v866, 0
      %vm871 = vmand %vm675, %vm867
      %vm872 = vmand %vm676, %vm868
      %vm873 = vmand %vm677, %vm869
      %vm874 = vmand %vm678, %vm870
      %vm875 = vcmp.lt.s32.totalorder %v863, 16
      %vm876 = vcmp.lt.s32.totalorder %v864, 16
      %vm877 = vcmp.lt.s32.totalorder %v865, 16
      %vm878 = vcmp.lt.s32.totalorder %v866, 16
      %vm879 = vmand %vm871, %vm875
      %vm880 = vmand %vm872, %vm876
      %vm881 = vmand %vm873, %vm877
      %vm882 = vmand %vm874, %vm878
      %v883 = vsel %vm879, 1, 0
      %v884 = vsel %vm880, 1, 0
      %v885 = vsel %vm881, 1, 0
      %v886 = vsel %vm882, 1, 0
      %v887 = vcvt.s32.f32 %v883
      %v888 = vcvt.s32.f32 %v884
      %v889 = vcvt.s32.f32 %v885
      %v890 = vcvt.s32.f32 %v886
      %v891 = vmul.f32 %v650, %v887
      %v892 = vmul.f32 %v652, %v888
      %v893 = vmul.f32 %v653, %v889
      %v894 = vmul.f32 %v658, %v890
      %899 = vrot.lane.b32.xlu0 %v641, 8
      %v900 = vpop.permute.xlu0 %899
      %901 = vrot.lane.b32.xlu0 %v642, 8
      %v902 = vpop.permute.xlu0 %901
      %903 = vrot.lane.b32.xlu0 %v643, 8
      %v904 = vpop.permute.xlu0 %903
      %905 = vrot.lane.b32.xlu0 %v644, 8
      %v906 = vpop.permute.xlu0 %905
      %915 = vrot.lane.b32.xlu0 %v703, 16
      %v916 = vpop.permute.xlu0 %915
      %917 = vrot.lane.b32.xlu0 %v704, 16
      %v918 = vpop.permute.xlu0 %917
      %919 = vrot.lane.b32.xlu0 %v705, 16
      %v920 = vpop.permute.xlu0 %919
      %921 = vrot.lane.b32.xlu0 %v706, 16
      %v922 = vpop.permute.xlu0 %921
      %931 = vrot.lane.b32.xlu0 %v749, 24
      %v932 = vpop.permute.xlu0 %931
      %933 = vrot.lane.b32.xlu0 %v750, 24
      %v934 = vpop.permute.xlu0 %933
      %935 = vrot.lane.b32.xlu0 %v751, 24
      %v936 = vpop.permute.xlu0 %935
      %937 = vrot.lane.b32.xlu0 %v752, 24
      %v938 = vpop.permute.xlu0 %937
      %943 = vrot.lane.b32.xlu0 %v416, 32
      %v944 = vpop.permute.xlu0 %943
      %945 = vrot.lane.b32.xlu0 %v417, 32
      %v946 = vpop.permute.xlu0 %945
      %947 = vrot.lane.b32.xlu0 %v418, 32
      %v948 = vpop.permute.xlu0 %947
      %949 = vrot.lane.b32.xlu0 %v419, 32
      %v950 = vpop.permute.xlu0 %949
      %959 = vrot.lane.b32.xlu0 %v795, 40
      %v960 = vpop.permute.xlu0 %959
      %961 = vrot.lane.b32.xlu0 %v796, 40
      %v962 = vpop.permute.xlu0 %961
      %963 = vrot.lane.b32.xlu0 %v797, 40
      %v964 = vpop.permute.xlu0 %963
      %965 = vrot.lane.b32.xlu0 %v798, 40
      %v966 = vpop.permute.xlu0 %965
      %975 = vrot.lane.b32.xlu0 %v827, 48
      %v976 = vpop.permute.xlu0 %975
      %977 = vrot.lane.b32.xlu0 %v828, 48
      %v978 = vpop.permute.xlu0 %977
      %979 = vrot.lane.b32.xlu0 %v829, 48
      %v980 = vpop.permute.xlu0 %979
      %981 = vrot.lane.b32.xlu0 %v830, 48
      %v982 = vpop.permute.xlu0 %981
      %991 = vrot.lane.b32.xlu0 %v859, 56
      %v992 = vpop.permute.xlu0 %991
      %993 = vrot.lane.b32.xlu0 %v860, 56
      %v994 = vpop.permute.xlu0 %993
      %995 = vrot.lane.b32.xlu0 %v861, 56
      %v996 = vpop.permute.xlu0 %995
      %997 = vrot.lane.b32.xlu0 %v862, 56
      %v998 = vpop.permute.xlu0 %997
      %1007 = vrot.lane.b32.xlu0 %v891, 64
      %v1008 = vpop.permute.xlu0 %1007
      %1009 = vrot.lane.b32.xlu0 %v892, 64
      %v1010 = vpop.permute.xlu0 %1009
      %1011 = vrot.lane.b32.xlu0 %v893, 64
      %v1012 = vpop.permute.xlu0 %1011
      %1013 = vrot.lane.b32.xlu0 %v894, 64
      %v1014 = vpop.permute.xlu0 %1013
      %vm1019 = vcmask 64512
      %v1020 = vsel %vm1019, %v583, %v900
      %v1021 = vsel %vm1019, %v584, %v902
      %v1022 = vsel %vm1019, %v585, %v904
      %v1023 = vsel %vm1019, %v586, %v906
      %vm1024 = vcmask 130048
      %v1025 = vsel %vm1024, %v1020, %v916
      %v1026 = vsel %vm1024, %v1021, %v918
      %v1027 = vsel %vm1024, %v1022, %v920
      %v1028 = vsel %vm1024, %v1023, %v922
      %vm1029 = vcmask 195584
      %v1030 = vsel %vm1029, %v1025, %v932
      %v1031 = vsel %vm1029, %v1026, %v934
      %v1032 = vsel %vm1029, %v1027, %v936
      %v1033 = vsel %vm1029, %v1028, %v938
      %v1034 = vsel %vm294, %v1030, %v944
      %v1035 = vsel %vm294, %v1031, %v946
      %v1036 = vsel %vm294, %v1032, %v948
      %v1037 = vsel %vm294, %v1033, %v950
      %vm1038 = vcmask 326656
      %v1039 = vsel %vm1038, %v1034, %v960
      %v1040 = vsel %vm1038, %v1035, %v962
      %v1041 = vsel %vm1038, %v1036, %v964
      %v1042 = vsel %vm1038, %v1037, %v966
      %vm1043 = vcmask 392192
      %v1044 = vsel %vm1043, %v1039, %v976
      %v1045 = vsel %vm1043, %v1040, %v978
      %v1046 = vsel %vm1043, %v1041, %v980
      %v1047 = vsel %vm1043, %v1042, %v982
      %vm1048 = vcmask 457728
      %v1049 = vsel %vm1048, %v1044, %v992
      %v1050 = vsel %vm1048, %v1045, %v994
      %v1051 = vsel %vm1048, %v1046, %v996
      %v1052 = vsel %vm1048, %v1047, %v998
      %vm1053 = vcmask 523264
      %v1054 = vsel %vm1053, %v1049, %v1008
      %v1055 = vsel %vm1053, %v1050, %v1010
      %v1056 = vsel %vm1053, %v1051, %v1012
      %v1057 = vsel %vm1053, %v1052, %v1014
      %v1058 = vld [vmem:[%s3] sm:$0xff]
      %v1059 = vld [vmem:[%s3 + $0x8] sm:$0xff]
      %v1060 = vld [vmem:[%s3 + $0x10] sm:$0xff]
      %v1061 = vld [vmem:[%s3 + $0x18] sm:$0xff]
      %v1062 = vld [vmem:[%s3 + $0x20] sm:$0xff]
      %v1063 = vld [vmem:[%s3 + $0x28] sm:$0xff]
      %v1064 = vld [vmem:[%s3 + $0x30] sm:$0xff]
      %v1065 = vld [vmem:[%s3 + $0x38] sm:$0xff]
      %v1066 = vld [vmem:[%s3 + $0x40] sm:$0xff]
      %v1067 = vld [vmem:[%s4] sm:$0x1]
      %v1069 = vperm.slane %v1067, 0
      %vm1071 = vcmask 588800
      %v1073 = vsel %vm1071, %v1054, 0
      %v1076 = vsel %vm1071, %v1055, 0
      %v1079 = vsel %vm1071, %v1056, 0
      %v1082 = vsel %vm1071, %v1057, 0
      %1084 = vmatpush.msra.mxu0 0.0
      %1085 = vmatpush.msra.mxu0 0.0
      %1086 = vmatpush.msra.mxu0 0.0
      %1087 = vmatpush.msra.mxu0 0.0
      %1088 = vmatpush.msra.mxu0 0.0
      %1089 = vmatpush.msra.mxu0 0.0
      %1090 = vmatpush.msra.mxu0 0.0
      %1091 = vmatpush.msra.mxu0 %v1066
      %1092 = vmatpush.msra.mxu0 %v1065
      %1093 = vmatpush.msra.mxu0 %v1064
      %1094 = vmatpush.msra.mxu0 %v1063
      %1095 = vmatpush.msra.mxu0 %v1062
      %1096 = vmatpush.msra.mxu0 %v1061
      %1097 = vmatpush.msra.mxu0 %v1060
      %1098 = vmatpush.msra.mxu0 %v1059
      %1099 = vmatpush.msra.mxu0 %v1058
      %1100 = vmatmul.f32.gmra.mxu0 %v1073
      %v1101 = vpop.f32.mrf.mxu0
      %v1102 = vadd.f32 %v1069, %v1101
      %1103 = vmatmul.f32.gmra.mxu0 %v1076
      %v1104 = vpop.f32.mrf.mxu0
      %v1105 = vadd.f32 %v1069, %v1104
      %1106 = vmatmul.f32.gmra.mxu0 %v1079
      %v1107 = vpop.f32.mrf.mxu0
      %v1108 = vadd.f32 %v1069, %v1107
      %1109 = vmatmul.f32.gmra.mxu0 %v1082
      %v1110 = vpop.f32.mrf.mxu0
      %v1111 = vadd.f32 %v1069, %v1110
      %1112 = vdwg.mxu0
      %v1113 = vmul.f32 %v1102, 1.702
      %v1114 = vmul.f32 %v1105, 1.702
      %v1115 = vmul.f32 %v1108, 1.702
      %v1116 = vmul.f32 %v1111, 1.702
      %v1117 = vxor.u32 %v1113, 2147483648
      %v1118 = vxor.u32 %v1114, 2147483648
      %v1119 = vxor.u32 %v1115, 2147483648
      %v1120 = vxor.u32 %v1116, 2147483648
      %v1121 = vmul.f32 %v1117, 1.442695
      %v1122 = vpow.pop %v1121
      %v1123 = vmul.f32 %v1118, 1.442695
      %v1124 = vpow.pop %v1123
      %v1125 = vmul.f32 %v1119, 1.442695
      %v1126 = vpow.pop %v1125
      %v1127 = vmul.f32 %v1120, 1.442695
      %v1128 = vpow.pop %v1127
      %v1129 = vadd.f32 %v1122, 1.0
      %v1130 = vadd.f32 %v1124, 1.0
      %v1131 = vadd.f32 %v1126, 1.0
      %v1132 = vadd.f32 %v1128, 1.0
      %v1133 = vrcp.pop %v1129
      %v1134 = vmul.f32 %v1129, %v1133
      %v1135 = vsub.f32 1.0, %v1134
      %v1136 = vmul.f32 %v1133, %v1135
      %v1137 = vadd.f32 %v1133, %v1136
      %vm1138 = vweird.f32 %v1129
      %vm1139 = vweird.f32 %v1133
      %vm1140 = vmor %vm1138, %vm1139
      %v1141 = vsel %vm1140, %v1133, %v1137
      %v1142 = vand.u32 2147483647, %v1129
      %vm1143 = vcmp.eq.f32.partialorder %v1142, 8.507059e+37
      %v1144 = vand.u32 %v1129, 2147483648
      %v1145 = vor.u32 1.1754944e-38, %v1144
      %v1146 = vsel %vm1143, %v1145, %v1141
      %v1147 = vmul.f32 1.0, %v1146
      %v1148 = vrcp.pop %v1130
      %v1149 = vmul.f32 %v1130, %v1148
      %v1150 = vsub.f32 1.0, %v1149
      %v1151 = vmul.f32 %v1148, %v1150
      %v1152 = vadd.f32 %v1148, %v1151
      %vm1153 = vweird.f32 %v1130
      %vm1154 = vweird.f32 %v1148
      %vm1155 = vmor %vm1153, %vm1154
      %v1156 = vsel %vm1155, %v1148, %v1152
      %v1157 = vand.u32 2147483647, %v1130
      %vm1158 = vcmp.eq.f32.partialorder %v1157, 8.507059e+37
      %v1159 = vand.u32 %v1130, 2147483648
      %v1160 = vor.u32 1.1754944e-38, %v1159
      %v1161 = vsel %vm1158, %v1160, %v1156
      %v1162 = vmul.f32 1.0, %v1161
      %v1163 = vrcp.pop %v1131
      %v1164 = vmul.f32 %v1131, %v1163
      %v1165 = vsub.f32 1.0, %v1164
      %v1166 = vmul.f32 %v1163, %v1165
      %v1167 = vadd.f32 %v1163, %v1166
      %vm1168 = vweird.f32 %v1131
      %vm1169 = vweird.f32 %v1163
      %vm1170 = vmor %vm1168, %vm1169
      %v1171 = vsel %vm1170, %v1163, %v1167
      %v1172 = vand.u32 2147483647, %v1131
      %vm1173 = vcmp.eq.f32.partialorder %v1172, 8.507059e+37
      %v1174 = vand.u32 %v1131, 2147483648
      %v1175 = vor.u32 1.1754944e-38, %v1174
      %v1176 = vsel %vm1173, %v1175, %v1171
      %v1177 = vmul.f32 1.0, %v1176
      %v1178 = vrcp.pop %v1132
      %v1179 = vmul.f32 %v1132, %v1178
      %v1180 = vsub.f32 1.0, %v1179
      %v1181 = vmul.f32 %v1178, %v1180
      %v1182 = vadd.f32 %v1178, %v1181
      %vm1183 = vweird.f32 %v1132
      %vm1184 = vweird.f32 %v1178
      %vm1185 = vmor %vm1183, %vm1184
      %v1186 = vsel %vm1185, %v1178, %v1182
      %v1187 = vand.u32 2147483647, %v1132
      %vm1188 = vcmp.eq.f32.partialorder %v1187, 8.507059e+37
      %v1189 = vand.u32 %v1132, 2147483648
      %v1190 = vor.u32 1.1754944e-38, %v1189
      %v1191 = vsel %vm1188, %v1190, %v1186
      %v1192 = vmul.f32 1.0, %v1191
      %v1193 = vmul.f32 %v1102, %v1147
      %v1194 = vmul.f32 %v1105, %v1162
      %v1195 = vmul.f32 %v1108, %v1177
      %v1196 = vmul.f32 %v1111, %v1192
      %v1197 = vld [vmem:[%s5] sm:$0xff]
      %v1198 = vld [vmem:[%s6] sm:$0x1]
      %v1200 = vperm.slane %v1198, 0
      %v1203 = vsel %vm1019, %v1193, 0
      %v1206 = vsel %vm1019, %v1194, 0
      %v1209 = vsel %vm1019, %v1195, 0
      %v1212 = vsel %vm1019, %v1196, 0
      %1214 = vmatpush.msra.mxu0 0.0
      %1215 = vmatpush.msra.mxu0 0.0
      %1216 = vmatpush.msra.mxu0 0.0
      %1217 = vmatpush.msra.mxu0 0.0
      %1218 = vmatpush.msra.mxu0 0.0
      %1219 = vmatpush.msra.mxu0 0.0
      %1220 = vmatpush.msra.mxu0 0.0
      %1221 = vmatpush.msra.mxu0 0.0
      %1222 = vmatpush.msra.mxu0 0.0
      %1223 = vmatpush.msra.mxu0 0.0
      %1224 = vmatpush.msra.mxu0 0.0
      %1225 = vmatpush.msra.mxu0 0.0
      %1226 = vmatpush.msra.mxu0 0.0
      %1227 = vmatpush.msra.mxu0 0.0
      %1228 = vmatpush.msra.mxu0 0.0
      %1229 = vmatpush.msra.mxu0 %v1197
      %1230 = vmatmul.f32.gmra.mxu0 %v1203
      %v1231 = vpop.f32.mrf.mxu0
      %v1232 = vadd.f32 %v1200, %v1231
      %1233 = vmatmul.f32.gmra.mxu0 %v1206
      %v1234 = vpop.f32.mrf.mxu0
      %v1235 = vadd.f32 %v1200, %v1234
      %1236 = vmatmul.f32.gmra.mxu0 %v1209
      %v1237 = vpop.f32.mrf.mxu0
      %v1238 = vadd.f32 %v1200, %v1237
      %1239 = vmatmul.f32.gmra.mxu0 %v1212
      %v1240 = vpop.f32.mrf.mxu0
      %v1241 = vadd.f32 %v1200, %v1240
      %1242 = vdwg.mxu0
      %1243 = vst.msk [vmem:[%s280] sm:$0xff] %vm294, %v1232
      %1244 = vst.msk [vmem:[%s280 + $0x8] sm:$0xff] %vm294, %v1235
      %1245 = vst.msk [vmem:[%s280 + $0x10] sm:$0xff] %vm294, %v1238
      %1246 = vst.msk [vmem:[%s280 + $0x18] sm:$0xff] %vm294, %v1241
      %s1247 = smul.u32 4, %s18
      %p1248 = scmp.lt.s32.totalorder %s1247, 7
      %s1249 = scalar_select %p1248, %s1247, 7
      %s1250 = smul.addr %s1249, 8
      %s1251 = scalar_lea.vmem %s7, %s1250
      // Predicated region
      $region49: #{tpu_custom_call.1} parent=47 // pred_check
        %p1252 = pneg %p188
      $region50: #{tpu_custom_call.1} parent=47 // pred_check_branch
        %1254 = sbr.rel (%p1252) target = $region52
      $region51: #{tpu_custom_call.1} parent=47 // pred_region
        %s1255 = smul.u32 4, %s18
      $region52: #{tpu_custom_call.1} parent=47 // pred_fallthru
        _
    $region48: #{tpu_custom_call.1} parent=5 // pred_fallthru
      _
    %p1256 = scmp.le.s32.totalorder 2, %s13
    // Predicated region
    $region53: #{tpu_custom_call.1} parent=5 // pred_check
      %p1257 = pneg %p1256
    $region54: #{tpu_custom_call.1} parent=5 // pred_check_branch
      %1259 = sbr.rel (%p1257) target = $region56
    $region55: #{tpu_custom_call.1} parent=5 // pred_region
      %s1260 = ssub.s32 %s13, 2
      // Predicated region
      $region57: #{tpu_custom_call.1} parent=55 // pred_check
        %p1261 = pneg %p194
      $region58: #{tpu_custom_call.1} parent=55 // pred_check_branch
        %1263 = sbr.rel (%p1261) target = $region60
      $region59: #{tpu_custom_call.1} parent=55 // pred_region
        %s1264 = smul.u32 4, %s19
        %p1265 = scmp.lt.s32.totalorder %s1264, 7
        %s1266 = scalar_select %p1265, %s1264, 7
        %s1267 = smul.addr %s1266, 8
        %s1268 = scalar_lea.vmem %s7, %s1267
      $region60: #{tpu_custom_call.1} parent=55 // pred_fallthru
        _
    $region56: #{tpu_custom_call.1} parent=5 // pred_fallthru
      _
  $region6: #{tpu_custom_call.1} parent=0 // loop_footer
    %s17 = sadd.s32 1, %s13
  $region7: #{tpu_custom_call.1} parent=0 // loop_footer_branch
    %12 = sbr.rel target = $region3
  $region8: #{tpu_custom_call.1} parent=0 // loop_exit
    _

</llo_original>
